<compile_context>
chip_gen: v6e
topology: v6e:2x2x1
jax: 0.10.0
libtpu: 0.0.40
codegen_flags: <defaults>
</compile_context>

<pallas_src>
import jax
import jax.numpy as jnp
from jax import lax
from jax.experimental import pallas as pl
from jax.experimental.pallas import tpu as pltpu


# -----------------------------------------------------------------------------
# Kernel
# -----------------------------------------------------------------------------
def lstm_tagger_kernel(sent_ref,     # SMEM (N, S)      int32  (scalar prefetch)
                       xf_ref,       # VMEM (V, 8*Hp)   f32    emb@Wih_f + all biases
                       xb_ref,       # VMEM (V, 8*Hp)   f32    emb@Wih_b
                       whh_ref,      # VMEM (2*Hp, 8*Hp) f32   block [fwd; bwd]
                       woutf_ref,    # VMEM (2*Hp, Tp)  f32    rows 0:H  = Wout_top
                       woutb_ref,    # VMEM (2*Hp, Tp)  f32    rows Hp:Hp+H = Wout_bot
                       bout_ref,     # VMEM (1, Tp)     f32    real bias | -1e30 pad
                       out_ref):     # VMEM (1, S, Tp)  f32
    n = pl.program_id(0)
    S = out_ref.shape[1]
    Hp2 = whh_ref.shape[0]           # 2*Hp == 128 (one full vreg lane row)

    whh = whh_ref[...]               # (2Hp, 8Hp)

    # Fused fwd+bwd recurrence, fully unrolled, state in registers.
    # Gate column layout: [i_f, i_b | f_f, f_b | g_f, g_b | o_f, o_b], each
    # pair block is 2*Hp = 128 lanes -> all slices are 128-lane aligned.
    h2 = jnp.zeros((1, Hp2), jnp.float32)   # [h_fwd(t) | h_bwd(S-1-t)]
    c2 = jnp.zeros((1, Hp2), jnp.float32)
    h_rows = []
    for t in range(S):
        rt = S - 1 - t
        # Per-step gather from the precomputed (V, 8Hp) projection tables.
        xrow = (xf_ref[pl.ds(sent_ref[n, t], 1), :] +
                xb_ref[pl.ds(sent_ref[n, rt], 1), :])            # (1, 8Hp)
        gates = xrow + jnp.dot(h2, whh, preferred_element_type=jnp.float32)
        i_g = jax.nn.sigmoid(gates[:, 0 * Hp2:1 * Hp2])
        f_g = jax.nn.sigmoid(gates[:, 1 * Hp2:2 * Hp2])
        g_g = jnp.tanh(gates[:, 2 * Hp2:3 * Hp2])
        o_g = jax.nn.sigmoid(gates[:, 3 * Hp2:4 * Hp2])
        c2 = f_g * c2 + i_g * g_g
        h2 = o_g * jnp.tanh(c2)
        h_rows.append(h2)            # keep full (1, 2Hp) row — no lane slicing

    # Sublane-only stacking (step order and reversed step order).
    h_steps = jnp.concatenate(h_rows, axis=0)          # (S, 2Hp)
    h_rev = jnp.concatenate(h_rows[::-1], axis=0)      # (S, 2Hp)

    # hidden2tag via two zero-padded split matmuls (exact) + log_softmax.
    tag_space = (jnp.dot(h_steps, woutf_ref[...],
                         preferred_element_type=jnp.float32)
                 + jnp.dot(h_rev, woutb_ref[...],
                           preferred_element_type=jnp.float32)
                 + bout_ref[...])                       # (S, Tp); pad lanes ~ -1e30
    m = jnp.max(tag_space, axis=1, keepdims=True)
    shifted = tag_space - m
    lse = jnp.log(jnp.sum(jnp.exp(shifted), axis=1, keepdims=True))
    out_ref[0] = shifted - lse


# -----------------------------------------------------------------------------
# Parameter packing (plain JAX, done once)
# -----------------------------------------------------------------------------
def pack_params(params):
    """Pack PyTorch-layout weights into the fused, lane-aligned kernel layout."""
    f32 = jnp.float32
    E = params["wih_f"].shape[0]
    H = params["whh_f"].shape[0]
    T = params["w_out"].shape[1]
    Hp = max(64, (((2 * H + 127) // 128) * 128) // 2)   # 2*Hp multiple of 128
    Tp = ((T + 127) // 128) * 128                       # lane-dense output

    def gate_blocks(w):  # (*, 4H), PyTorch gate order [i, f, g, o]
        return [w[:, g * H:(g + 1) * H] for g in range(4)]

    def cpad(b):  # pad gate-block columns H -> Hp with exact zeros
        return jnp.pad(b.astype(f32), ((0, 0), (0, Hp - H)))

    zE = jnp.zeros((E, Hp), f32)
    zH = jnp.zeros((H, Hp), f32)

    fi, ff, fg, fo = gate_blocks(params["wih_f"])
    bi, bf_, bg, bo = gate_blocks(params["wih_b"])
    # interleaved column layout: [i_f, i_b, f_f, f_b, g_f, g_b, o_f, o_b]
    wih_f_pad = jnp.concatenate(
        [cpad(fi), zE, cpad(ff), zE, cpad(fg), zE, cpad(fo), zE], axis=1)
    wih_b_pad = jnp.concatenate(
        [zE, cpad(bi), zE, cpad(bf_), zE, cpad(bg), zE, cpad(bo)], axis=1)

    bfb = gate_blocks(params["b_f"])
    bbb = gate_blocks(params["b_b"])
    b_cat = jnp.concatenate(
        [cpad(bfb[0]), cpad(bbb[0]), cpad(bfb[1]), cpad(bbb[1]),
         cpad(bfb[2]), cpad(bbb[2]), cpad(bfb[3]), cpad(bbb[3])], axis=1)  # (1,8Hp)

    emb = params["emb_table"].astype(f32)
    xf_table = emb @ wih_f_pad + b_cat          # (V, 8Hp): fwd x-proj + all biases
    xb_table = emb @ wih_b_pad                  # (V, 8Hp): bwd x-proj

    hfi, hff, hfg, hfo = gate_blocks(params["whh_f"])
    hbi, hbf, hbg, hbo = gate_blocks(params["whh_b"])
    top = jnp.concatenate(
        [cpad(hfi), zH, cpad(hff), zH, cpad(hfg), zH, cpad(hfo), zH], axis=1)
    bot = jnp.concatenate(
        [zH, cpad(hbi), zH, cpad(hbf), zH, cpad(hbg), zH, cpad(hbo)], axis=1)
    top = jnp.pad(top, ((0, Hp - H), (0, 0)))   # padded rows exactly 0
    bot = jnp.pad(bot, ((0, Hp - H), (0, 0)))
    whh_blk = jnp.concatenate([top, bot], axis=0)          # (2Hp, 8Hp)

    w_out = params["w_out"].astype(f32)                    # (2H, T)
    wout_fwd = jnp.zeros((2 * Hp, Tp), f32).at[:H, :T].set(w_out[:H])
    wout_bwd = jnp.zeros((2 * Hp, Tp), f32).at[Hp:Hp + H, :T].set(w_out[H:])
    b_out_pad = (jnp.full((1, Tp), -1e30, f32)
                 .at[:, :T].set(params["b_out"].astype(f32)))

    return {
        "xf_table": xf_table,
        "xb_table": xb_table,
        "whh_blk": whh_blk,
        "wout_fwd": wout_fwd,
        "wout_bwd": wout_bwd,
        "b_out_pad": b_out_pad,
        "tagset_size": T,
    }


# -----------------------------------------------------------------------------
# Wrappers
# -----------------------------------------------------------------------------
def lstm_tagger_forward_batch(sentences, packed):
    """Run many (equal-length) sentences in one pallas_call, grid over sentences."""
    sentences = jnp.asarray(sentences, jnp.int32)
    N, S = sentences.shape
    # TODO(synk): for S > ~32, bucket sentence lengths and switch the in-kernel
    # recurrence to lax.fori_loop with a small VMEM scratch (bounded unroll).
    assert S <= 32, "fully-unrolled recurrence is intended for short sentences"
    T = packed["tagset_size"]
    V, G = packed["xf_table"].shape          # G = 8*Hp
    Hp2 = packed["whh_blk"].shape[0]         # 2*Hp
    Tp = packed["b_out_pad"].shape[1]

    out = pl.pallas_call(
        lstm_tagger_kernel,
        out_shape=jax.ShapeDtypeStruct((N, S, Tp), jnp.float32),
        grid_spec=pltpu.PrefetchScalarGridSpec(
            num_scalar_prefetch=1,           # sentences -> SMEM
            grid=(N,),
            in_specs=[                       # constant index_map -> VMEM-resident
                pl.BlockSpec((V, G), lambda n, sent: (0, 0)),      # xf_table
                pl.BlockSpec((V, G), lambda n, sent: (0, 0)),      # xb_table
                pl.BlockSpec((Hp2, G), lambda n, sent: (0, 0)),    # whh_blk
                pl.BlockSpec((Hp2, Tp), lambda n, sent: (0, 0)),   # wout_fwd
                pl.BlockSpec((Hp2, Tp), lambda n, sent: (0, 0)),   # wout_bwd
                pl.BlockSpec((1, Tp), lambda n, sent: (0, 0)),     # b_out_pad
            ],
            out_specs=pl.BlockSpec((1, S, Tp), lambda n, sent: (n, 0, 0)),
        ),
        compiler_params=pltpu.CompilerParams(
            dimension_semantics=("parallel",)),   # v7x: sentences across both TCs
    )(sentences,
      packed["xf_table"], packed["xb_table"], packed["whh_blk"],
      packed["wout_fwd"], packed["wout_bwd"], packed["b_out_pad"])
    return out[:, :, :T]


def lstm_tagger_forward(sentence, packed):
    """Forward pass of LSTMTagger for one sentence (eval mode)."""
    # TODO(synk): Dropout (p=0.1) omitted — forward implemented in eval mode.
    return lstm_tagger_forward_batch(sentence[None, :], packed)[0]


# -----------------------------------------------------------------------------
# Pure-JAX reference (mirrors PyTorch nn.LSTM bidirectional, batch=1)
# -----------------------------------------------------------------------------
def reference_forward(sentence, params):
    embeds = params["emb_table"][sentence].astype(jnp.float32)
    H = params["whh_f"].shape[0]

    def cell(x, h, c, wih, whh, b):
        gates = x @ wih + h @ whh + b
        i_g = jax.nn.sigmoid(gates[:, 0 * H:1 * H])
        f_g = jax.nn.sigmoid(gates[:, 1 * H:2 * H])
        g_g = jnp.tanh(gates[:, 2 * H:3 * H])
        o_g = jax.nn.sigmoid(gates[:, 3 * H:4 * H])
        c_new = f_g * c + i_g * g_g
        h_new = o_g * jnp.tanh(c_new)
        return h_new, c_new

    def run_dir(xs, wih, whh, b):
        def step(carry, x):
            h, c = carry
            h, c = cell(x[None, :], h, c, wih, whh, b)
            return (h, c), h[0]
        h0 = jnp.zeros((1, H), jnp.float32)
        c0 = jnp.zeros((1, H), jnp.float32)
        _, hs = lax.scan(step, (h0, c0), xs)
        return hs

    hf = run_dir(embeds, params["wih_f"], params["whh_f"], params["b_f"])
    hb = run_dir(embeds[::-1], params["wih_b"], params["whh_b"], params["b_b"])[::-1]
    lstm_out = jnp.concatenate([hf, hb], axis=-1)
    tag_space = lstm_out @ params["w_out"] + params["b_out"]
    return jax.nn.log_softmax(tag_space, axis=1)


def init_params(key, vocab_size, embedding_dim, hidden_dim, tagset_size):
    ks = jax.random.split(key, 12)
    E, H, T = embedding_dim, hidden_dim, tagset_size
    s = 1.0 / jnp.sqrt(H)

    emb_table = jax.random.normal(ks[0], (vocab_size, E), jnp.float32)
    # padding_idx = vocab_size - 1 -> zero embedding row.
    emb_table = emb_table.at[vocab_size - 1].set(0.0)

    def unif(k, shape):
        return jax.random.uniform(k, shape, jnp.float32, -s, s)

    return {
        "emb_table": emb_table,
        # forward direction (stored transposed: (E,4H)/(H,4H), gate order i,f,g,o)
        "wih_f": unif(ks[1], (E, 4 * H)),
        "whh_f": unif(ks[2], (H, 4 * H)),
        "b_f": unif(ks[3], (1, 4 * H)) + unif(ks[4], (1, 4 * H)),  # b_ih + b_hh
        # reverse direction
        "wih_b": unif(ks[5], (E, 4 * H)),
        "whh_b": unif(ks[6], (H, 4 * H)),
        "b_b": unif(ks[7], (1, 4 * H)) + unif(ks[8], (1, 4 * H)),
        # hidden2tag (stored transposed: (2H, T))
        "w_out": unif(ks[9], (2 * H, T)),
        "b_out": unif(ks[10], (1, T)),
    }


if __name__ == "__main__":
    embedding_dim = 32
    hidden_dim = 32
    vocab_size = 16
    tagset_size = 8
    seq_len = 8
    num_sentences = 4

    key = jax.random.PRNGKey(0)
    kp, ks = jax.random.split(key)
    params = init_params(kp, vocab_size, embedding_dim, hidden_dim, tagset_size)
    packed = pack_params(params)
    sentences = jax.random.randint(ks, (num_sentences, seq_len), 0, vocab_size,
                                   dtype=jnp.int32)

    # Batched call (grid over sentences, "parallel" axis).
    out_batch = jax.block_until_ready(lstm_tagger_forward_batch(sentences, packed))
    assert out_batch.shape == (num_sentences, seq_len, tagset_size)

    # Single-sentence path (matches the PyTorch module forward, batch=1).
    out_single = jax.block_until_ready(lstm_tagger_forward(sentences[0], packed))
    assert out_single.shape == (seq_len, tagset_size)

    for b in range(num_sentences):
        ref = reference_forward(sentences[b], params)
        assert jnp.allclose(out_batch[b], ref, atol=2e-4, rtol=2e-4), \
            f"mismatch vs reference at sentence {b}"
    assert jnp.allclose(out_single, out_batch[0], atol=1e-5)

    print("KERNEL_OK")
</pallas_src>

<mosaic_0001>
module attributes {stable_mosaic.version = 11 : i64} {
  func.func @lstm_tagger_kernel(%arg0: i32, %arg1: memref<4x8xi32, #tpu.memory_space<smem>>, %arg2: memref<16x512xf32, #tpu.memory_space<vmem>>, %arg3: memref<16x512xf32, #tpu.memory_space<vmem>>, %arg4: memref<128x512xf32, #tpu.memory_space<vmem>>, %arg5: memref<128x128xf32, #tpu.memory_space<vmem>>, %arg6: memref<128x128xf32, #tpu.memory_space<vmem>>, %arg7: memref<1x128xf32, #tpu.memory_space<vmem>>, %arg8: memref<1x8x128xf32, #tpu.memory_space<vmem>>) attributes {dimension_semantics = [#tpu.dimension_semantics<parallel>], iteration_bounds = array<i64: 4>, scalar_prefetch = 1 : i64, scratch_operands = 0 : i64, tpu.core_type = #tpu.core_type<tc>, window_params = [{pipeline_mode = #tpu.pipeline_mode<synchronous>, transform_indices = @transform_0, window_bounds = array<i64: 16, 512>}, {pipeline_mode = #tpu.pipeline_mode<synchronous>, transform_indices = @transform_1, window_bounds = array<i64: 16, 512>}, {pipeline_mode = #tpu.pipeline_mode<synchronous>, transform_indices = @transform_2, window_bounds = array<i64: 128, 512>}, {pipeline_mode = #tpu.pipeline_mode<synchronous>, transform_indices = @transform_3, window_bounds = array<i64: 128, 128>}, {pipeline_mode = #tpu.pipeline_mode<synchronous>, transform_indices = @transform_4, window_bounds = array<i64: 128, 128>}, {pipeline_mode = #tpu.pipeline_mode<synchronous>, transform_indices = @transform_5, window_bounds = array<i64: 1, 128>}, {transform_indices = @transform_6, window_bounds = array<i64: 1, 8, 128>}]} {
    %c0 = arith.constant 0 : index
    %c0_0 = arith.constant 0 : index
    %0 = vector.load %arg4[%c0, %c0_0] : memref<128x512xf32, #tpu.memory_space<vmem>>, vector<128x512xf32>
    %cst = arith.constant 0.000000e+00 : f32
    %1 = vector.broadcast %cst : f32 to vector<1x128xf32>
    %cst_1 = arith.constant 0.000000e+00 : f32
    %2 = vector.broadcast %cst_1 : f32 to vector<1x128xf32>
    %3 = arith.index_cast %arg0 : i32 to index
    %c0_2 = arith.constant 0 : index
    %4 = memref.load %arg1[%3, %c0_2] : memref<4x8xi32, #tpu.memory_space<smem>>
    %5 = arith.index_cast %4 : i32 to index
    %c0_3 = arith.constant 0 : index
    %6 = vector.load %arg2[%5, %c0_3] : memref<16x512xf32, #tpu.memory_space<vmem>>, vector<1x512xf32>
    %7 = arith.index_cast %arg0 : i32 to index
    %c7 = arith.constant 7 : index
    %8 = memref.load %arg1[%7, %c7] : memref<4x8xi32, #tpu.memory_space<smem>>
    %9 = arith.index_cast %8 : i32 to index
    %c0_4 = arith.constant 0 : index
    %10 = vector.load %arg3[%9, %c0_4] : memref<16x512xf32, #tpu.memory_space<vmem>>, vector<1x512xf32>
    %11 = arith.addf %6, %10 : vector<1x512xf32>
    %cst_5 = arith.constant dense<0.000000e+00> : vector<1x512xf32>
    %12 = tpu.matmul %1, %0, %cst_5 {dimension_numbers = #tpu.dot_dimension_numbers<[1], [0], [0], [1], [0, 0, 1, 1], [], []>} : vector<1x128xf32>, vector<128x512xf32>, vector<1x512xf32> -> vector<1x512xf32>
    %13 = arith.addf %11, %12 : vector<1x512xf32>
    %14 = vector.extract_strided_slice %13 {offsets = [0, 0], sizes = [1, 128], strides = [1, 1]} : vector<1x512xf32> to vector<1x128xf32>
    %15 = arith.negf %14 : vector<1x128xf32>
    %16 = math.exp %15 : vector<1x128xf32>
    %cst_6 = arith.constant 1.000000e+00 : f32
    %17 = vector.broadcast %cst_6 : f32 to vector<1x128xf32>
    %18 = arith.addf %17, %16 : vector<1x128xf32>
    %19 = arith.divf %17, %18 : vector<1x128xf32>
    %20 = vector.extract_strided_slice %13 {offsets = [0, 128], sizes = [1, 128], strides = [1, 1]} : vector<1x512xf32> to vector<1x128xf32>
    %21 = arith.negf %20 : vector<1x128xf32>
    %22 = math.exp %21 : vector<1x128xf32>
    %cst_7 = arith.constant 1.000000e+00 : f32
    %23 = vector.broadcast %cst_7 : f32 to vector<1x128xf32>
    %24 = arith.addf %23, %22 : vector<1x128xf32>
    %25 = arith.divf %23, %24 : vector<1x128xf32>
    %26 = vector.extract_strided_slice %13 {offsets = [0, 256], sizes = [1, 128], strides = [1, 1]} : vector<1x512xf32> to vector<1x128xf32>
    %27 = math.tanh %26 : vector<1x128xf32>
    %28 = vector.extract_strided_slice %13 {offsets = [0, 384], sizes = [1, 128], strides = [1, 1]} : vector<1x512xf32> to vector<1x128xf32>
    %29 = arith.negf %28 : vector<1x128xf32>
    %30 = math.exp %29 : vector<1x128xf32>
    %cst_8 = arith.constant 1.000000e+00 : f32
    %31 = vector.broadcast %cst_8 : f32 to vector<1x128xf32>
    %32 = arith.addf %31, %30 : vector<1x128xf32>
    %33 = arith.divf %31, %32 : vector<1x128xf32>
    %34 = arith.mulf %25, %2 : vector<1x128xf32>
    %35 = arith.mulf %19, %27 : vector<1x128xf32>
    %36 = arith.addf %34, %35 : vector<1x128xf32>
    %37 = math.tanh %36 : vector<1x128xf32>
    %38 = arith.mulf %33, %37 : vector<1x128xf32>
    %39 = arith.index_cast %arg0 : i32 to index
    %c1 = arith.constant 1 : index
    %40 = memref.load %arg1[%39, %c1] : memref<4x8xi32, #tpu.memory_space<smem>>
    %41 = arith.index_cast %40 : i32 to index
    %c0_9 = arith.constant 0 : index
    %42 = vector.load %arg2[%41, %c0_9] : memref<16x512xf32, #tpu.memory_space<vmem>>, vector<1x512xf32>
    %43 = arith.index_cast %arg0 : i32 to index
    %c6 = arith.constant 6 : index
    %44 = memref.load %arg1[%43, %c6] : memref<4x8xi32, #tpu.memory_space<smem>>
    %45 = arith.index_cast %44 : i32 to index
    %c0_10 = arith.constant 0 : index
    %46 = vector.load %arg3[%45, %c0_10] : memref<16x512xf32, #tpu.memory_space<vmem>>, vector<1x512xf32>
    %47 = arith.addf %42, %46 : vector<1x512xf32>
    %cst_11 = arith.constant dense<0.000000e+00> : vector<1x512xf32>
    %48 = tpu.matmul %38, %0, %cst_11 {dimension_numbers = #tpu.dot_dimension_numbers<[1], [0], [0], [1], [0, 0, 1, 1], [], []>} : vector<1x128xf32>, vector<128x512xf32>, vector<1x512xf32> -> vector<1x512xf32>
    %49 = arith.addf %47, %48 : vector<1x512xf32>
    %50 = vector.extract_strided_slice %49 {offsets = [0, 0], sizes = [1, 128], strides = [1, 1]} : vector<1x512xf32> to vector<1x128xf32>
    %51 = arith.negf %50 : vector<1x128xf32>
    %52 = math.exp %51 : vector<1x128xf32>
    %cst_12 = arith.constant 1.000000e+00 : f32
    %53 = vector.broadcast %cst_12 : f32 to vector<1x128xf32>
    %54 = arith.addf %53, %52 : vector<1x128xf32>
    %55 = arith.divf %53, %54 : vector<1x128xf32>
    %56 = vector.extract_strided_slice %49 {offsets = [0, 128], sizes = [1, 128], strides = [1, 1]} : vector<1x512xf32> to vector<1x128xf32>
    %57 = arith.negf %56 : vector<1x128xf32>
    %58 = math.exp %57 : vector<1x128xf32>
    %cst_13 = arith.constant 1.000000e+00 : f32
    %59 = vector.broadcast %cst_13 : f32 to vector<1x128xf32>
    %60 = arith.addf %59, %58 : vector<1x128xf32>
    %61 = arith.divf %59, %60 : vector<1x128xf32>
    %62 = vector.extract_strided_slice %49 {offsets = [0, 256], sizes = [1, 128], strides = [1, 1]} : vector<1x512xf32> to vector<1x128xf32>
    %63 = math.tanh %62 : vector<1x128xf32>
    %64 = vector.extract_strided_slice %49 {offsets = [0, 384], sizes = [1, 128], strides = [1, 1]} : vector<1x512xf32> to vector<1x128xf32>
    %65 = arith.negf %64 : vector<1x128xf32>
    %66 = math.exp %65 : vector<1x128xf32>
    %cst_14 = arith.constant 1.000000e+00 : f32
    %67 = vector.broadcast %cst_14 : f32 to vector<1x128xf32>
    %68 = arith.addf %67, %66 : vector<1x128xf32>
    %69 = arith.divf %67, %68 : vector<1x128xf32>
    %70 = arith.mulf %61, %36 : vector<1x128xf32>
    %71 = arith.mulf %55, %63 : vector<1x128xf32>
    %72 = arith.addf %70, %71 : vector<1x128xf32>
    %73 = math.tanh %72 : vector<1x128xf32>
    %74 = arith.mulf %69, %73 : vector<1x128xf32>
    %75 = arith.index_cast %arg0 : i32 to index
    %c2 = arith.constant 2 : index
    %76 = memref.load %arg1[%75, %c2] : memref<4x8xi32, #tpu.memory_space<smem>>
    %77 = arith.index_cast %76 : i32 to index
    %c0_15 = arith.constant 0 : index
    %78 = vector.load %arg2[%77, %c0_15] : memref<16x512xf32, #tpu.memory_space<vmem>>, vector<1x512xf32>
    %79 = arith.index_cast %arg0 : i32 to index
    %c5 = arith.constant 5 : index
    %80 = memref.load %arg1[%79, %c5] : memref<4x8xi32, #tpu.memory_space<smem>>
    %81 = arith.index_cast %80 : i32 to index
    %c0_16 = arith.constant 0 : index
    %82 = vector.load %arg3[%81, %c0_16] : memref<16x512xf32, #tpu.memory_space<vmem>>, vector<1x512xf32>
    %83 = arith.addf %78, %82 : vector<1x512xf32>
    %cst_17 = arith.constant dense<0.000000e+00> : vector<1x512xf32>
    %84 = tpu.matmul %74, %0, %cst_17 {dimension_numbers = #tpu.dot_dimension_numbers<[1], [0], [0], [1], [0, 0, 1, 1], [], []>} : vector<1x128xf32>, vector<128x512xf32>, vector<1x512xf32> -> vector<1x512xf32>
    %85 = arith.addf %83, %84 : vector<1x512xf32>
    %86 = vector.extract_strided_slice %85 {offsets = [0, 0], sizes = [1, 128], strides = [1, 1]} : vector<1x512xf32> to vector<1x128xf32>
    %87 = arith.negf %86 : vector<1x128xf32>
    %88 = math.exp %87 : vector<1x128xf32>
    %cst_18 = arith.constant 1.000000e+00 : f32
    %89 = vector.broadcast %cst_18 : f32 to vector<1x128xf32>
    %90 = arith.addf %89, %88 : vector<1x128xf32>
    %91 = arith.divf %89, %90 : vector<1x128xf32>
    %92 = vector.extract_strided_slice %85 {offsets = [0, 128], sizes = [1, 128], strides = [1, 1]} : vector<1x512xf32> to vector<1x128xf32>
    %93 = arith.negf %92 : vector<1x128xf32>
    %94 = math.exp %93 : vector<1x128xf32>
    %cst_19 = arith.constant 1.000000e+00 : f32
    %95 = vector.broadcast %cst_19 : f32 to vector<1x128xf32>
    %96 = arith.addf %95, %94 : vector<1x128xf32>
    %97 = arith.divf %95, %96 : vector<1x128xf32>
    %98 = vector.extract_strided_slice %85 {offsets = [0, 256], sizes = [1, 128], strides = [1, 1]} : vector<1x512xf32> to vector<1x128xf32>
    %99 = math.tanh %98 : vector<1x128xf32>
    %100 = vector.extract_strided_slice %85 {offsets = [0, 384], sizes = [1, 128], strides = [1, 1]} : vector<1x512xf32> to vector<1x128xf32>
    %101 = arith.negf %100 : vector<1x128xf32>
    %102 = math.exp %101 : vector<1x128xf32>
    %cst_20 = arith.constant 1.000000e+00 : f32
    %103 = vector.broadcast %cst_20 : f32 to vector<1x128xf32>
    %104 = arith.addf %103, %102 : vector<1x128xf32>
    %105 = arith.divf %103, %104 : vector<1x128xf32>
    %106 = arith.mulf %97, %72 : vector<1x128xf32>
    %107 = arith.mulf %91, %99 : vector<1x128xf32>
    %108 = arith.addf %106, %107 : vector<1x128xf32>
    %109 = math.tanh %108 : vector<1x128xf32>
    %110 = arith.mulf %105, %109 : vector<1x128xf32>
    %111 = arith.index_cast %arg0 : i32 to index
    %c3 = arith.constant 3 : index
    %112 = memref.load %arg1[%111, %c3] : memref<4x8xi32, #tpu.memory_space<smem>>
    %113 = arith.index_cast %112 : i32 to index
    %c0_21 = arith.constant 0 : index
    %114 = vector.load %arg2[%113, %c0_21] : memref<16x512xf32, #tpu.memory_space<vmem>>, vector<1x512xf32>
    %115 = arith.index_cast %arg0 : i32 to index
    %c4 = arith.constant 4 : index
    %116 = memref.load %arg1[%115, %c4] : memref<4x8xi32, #tpu.memory_space<smem>>
    %117 = arith.index_cast %116 : i32 to index
    %c0_22 = arith.constant 0 : index
    %118 = vector.load %arg3[%117, %c0_22] : memref<16x512xf32, #tpu.memory_space<vmem>>, vector<1x512xf32>
    %119 = arith.addf %114, %118 : vector<1x512xf32>
    %cst_23 = arith.constant dense<0.000000e+00> : vector<1x512xf32>
    %120 = tpu.matmul %110, %0, %cst_23 {dimension_numbers = #tpu.dot_dimension_numbers<[1], [0], [0], [1], [0, 0, 1, 1], [], []>} : vector<1x128xf32>, vector<128x512xf32>, vector<1x512xf32> -> vector<1x512xf32>
    %121 = arith.addf %119, %120 : vector<1x512xf32>
    %122 = vector.extract_strided_slice %121 {offsets = [0, 0], sizes = [1, 128], strides = [1, 1]} : vector<1x512xf32> to vector<1x128xf32>
    %123 = arith.negf %122 : vector<1x128xf32>
    %124 = math.exp %123 : vector<1x128xf32>
    %cst_24 = arith.constant 1.000000e+00 : f32
    %125 = vector.broadcast %cst_24 : f32 to vector<1x128xf32>
    %126 = arith.addf %125, %124 : vector<1x128xf32>
    %127 = arith.divf %125, %126 : vector<1x128xf32>
    %128 = vector.extract_strided_slice %121 {offsets = [0, 128], sizes = [1, 128], strides = [1, 1]} : vector<1x512xf32> to vector<1x128xf32>
    %129 = arith.negf %128 : vector<1x128xf32>
    %130 = math.exp %129 : vector<1x128xf32>
    %cst_25 = arith.constant 1.000000e+00 : f32
    %131 = vector.broadcast %cst_25 : f32 to vector<1x128xf32>
    %132 = arith.addf %131, %130 : vector<1x128xf32>
    %133 = arith.divf %131, %132 : vector<1x128xf32>
    %134 = vector.extract_strided_slice %121 {offsets = [0, 256], sizes = [1, 128], strides = [1, 1]} : vector<1x512xf32> to vector<1x128xf32>
    %135 = math.tanh %134 : vector<1x128xf32>
    %136 = vector.extract_strided_slice %121 {offsets = [0, 384], sizes = [1, 128], strides = [1, 1]} : vector<1x512xf32> to vector<1x128xf32>
    %137 = arith.negf %136 : vector<1x128xf32>
    %138 = math.exp %137 : vector<1x128xf32>
    %cst_26 = arith.constant 1.000000e+00 : f32
    %139 = vector.broadcast %cst_26 : f32 to vector<1x128xf32>
    %140 = arith.addf %139, %138 : vector<1x128xf32>
    %141 = arith.divf %139, %140 : vector<1x128xf32>
    %142 = arith.mulf %133, %108 : vector<1x128xf32>
    %143 = arith.mulf %127, %135 : vector<1x128xf32>
    %144 = arith.addf %142, %143 : vector<1x128xf32>
    %145 = math.tanh %144 : vector<1x128xf32>
    %146 = arith.mulf %141, %145 : vector<1x128xf32>
    %147 = arith.index_cast %arg0 : i32 to index
    %c4_27 = arith.constant 4 : index
    %148 = memref.load %arg1[%147, %c4_27] : memref<4x8xi32, #tpu.memory_space<smem>>
    %149 = arith.index_cast %148 : i32 to index
    %c0_28 = arith.constant 0 : index
    %150 = vector.load %arg2[%149, %c0_28] : memref<16x512xf32, #tpu.memory_space<vmem>>, vector<1x512xf32>
    %151 = arith.index_cast %arg0 : i32 to index
    %c3_29 = arith.constant 3 : index
    %152 = memref.load %arg1[%151, %c3_29] : memref<4x8xi32, #tpu.memory_space<smem>>
    %153 = arith.index_cast %152 : i32 to index
    %c0_30 = arith.constant 0 : index
    %154 = vector.load %arg3[%153, %c0_30] : memref<16x512xf32, #tpu.memory_space<vmem>>, vector<1x512xf32>
    %155 = arith.addf %150, %154 : vector<1x512xf32>
    %cst_31 = arith.constant dense<0.000000e+00> : vector<1x512xf32>
    %156 = tpu.matmul %146, %0, %cst_31 {dimension_numbers = #tpu.dot_dimension_numbers<[1], [0], [0], [1], [0, 0, 1, 1], [], []>} : vector<1x128xf32>, vector<128x512xf32>, vector<1x512xf32> -> vector<1x512xf32>
    %157 = arith.addf %155, %156 : vector<1x512xf32>
    %158 = vector.extract_strided_slice %157 {offsets = [0, 0], sizes = [1, 128], strides = [1, 1]} : vector<1x512xf32> to vector<1x128xf32>
    %159 = arith.negf %158 : vector<1x128xf32>
    %160 = math.exp %159 : vector<1x128xf32>
    %cst_32 = arith.constant 1.000000e+00 : f32
    %161 = vector.broadcast %cst_32 : f32 to vector<1x128xf32>
    %162 = arith.addf %161, %160 : vector<1x128xf32>
    %163 = arith.divf %161, %162 : vector<1x128xf32>
    %164 = vector.extract_strided_slice %157 {offsets = [0, 128], sizes = [1, 128], strides = [1, 1]} : vector<1x512xf32> to vector<1x128xf32>
    %165 = arith.negf %164 : vector<1x128xf32>
    %166 = math.exp %165 : vector<1x128xf32>
    %cst_33 = arith.constant 1.000000e+00 : f32
    %167 = vector.broadcast %cst_33 : f32 to vector<1x128xf32>
    %168 = arith.addf %167, %166 : vector<1x128xf32>
    %169 = arith.divf %167, %168 : vector<1x128xf32>
    %170 = vector.extract_strided_slice %157 {offsets = [0, 256], sizes = [1, 128], strides = [1, 1]} : vector<1x512xf32> to vector<1x128xf32>
    %171 = math.tanh %170 : vector<1x128xf32>
    %172 = vector.extract_strided_slice %157 {offsets = [0, 384], sizes = [1, 128], strides = [1, 1]} : vector<1x512xf32> to vector<1x128xf32>
    %173 = arith.negf %172 : vector<1x128xf32>
    %174 = math.exp %173 : vector<1x128xf32>
    %cst_34 = arith.constant 1.000000e+00 : f32
    %175 = vector.broadcast %cst_34 : f32 to vector<1x128xf32>
    %176 = arith.addf %175, %174 : vector<1x128xf32>
    %177 = arith.divf %175, %176 : vector<1x128xf32>
    %178 = arith.mulf %169, %144 : vector<1x128xf32>
    %179 = arith.mulf %163, %171 : vector<1x128xf32>
    %180 = arith.addf %178, %179 : vector<1x128xf32>
    %181 = math.tanh %180 : vector<1x128xf32>
    %182 = arith.mulf %177, %181 : vector<1x128xf32>
    %183 = arith.index_cast %arg0 : i32 to index
    %c5_35 = arith.constant 5 : index
    %184 = memref.load %arg1[%183, %c5_35] : memref<4x8xi32, #tpu.memory_space<smem>>
    %185 = arith.index_cast %184 : i32 to index
    %c0_36 = arith.constant 0 : index
    %186 = vector.load %arg2[%185, %c0_36] : memref<16x512xf32, #tpu.memory_space<vmem>>, vector<1x512xf32>
    %187 = arith.index_cast %arg0 : i32 to index
    %c2_37 = arith.constant 2 : index
    %188 = memref.load %arg1[%187, %c2_37] : memref<4x8xi32, #tpu.memory_space<smem>>
    %189 = arith.index_cast %188 : i32 to index
    %c0_38 = arith.constant 0 : index
    %190 = vector.load %arg3[%189, %c0_38] : memref<16x512xf32, #tpu.memory_space<vmem>>, vector<1x512xf32>
    %191 = arith.addf %186, %190 : vector<1x512xf32>
    %cst_39 = arith.constant dense<0.000000e+00> : vector<1x512xf32>
    %192 = tpu.matmul %182, %0, %cst_39 {dimension_numbers = #tpu.dot_dimension_numbers<[1], [0], [0], [1], [0, 0, 1, 1], [], []>} : vector<1x128xf32>, vector<128x512xf32>, vector<1x512xf32> -> vector<1x512xf32>
    %193 = arith.addf %191, %192 : vector<1x512xf32>
    %194 = vector.extract_strided_slice %193 {offsets = [0, 0], sizes = [1, 128], strides = [1, 1]} : vector<1x512xf32> to vector<1x128xf32>
    %195 = arith.negf %194 : vector<1x128xf32>
    %196 = math.exp %195 : vector<1x128xf32>
    %cst_40 = arith.constant 1.000000e+00 : f32
    %197 = vector.broadcast %cst_40 : f32 to vector<1x128xf32>
    %198 = arith.addf %197, %196 : vector<1x128xf32>
    %199 = arith.divf %197, %198 : vector<1x128xf32>
    %200 = vector.extract_strided_slice %193 {offsets = [0, 128], sizes = [1, 128], strides = [1, 1]} : vector<1x512xf32> to vector<1x128xf32>
    %201 = arith.negf %200 : vector<1x128xf32>
    %202 = math.exp %201 : vector<1x128xf32>
    %cst_41 = arith.constant 1.000000e+00 : f32
    %203 = vector.broadcast %cst_41 : f32 to vector<1x128xf32>
    %204 = arith.addf %203, %202 : vector<1x128xf32>
    %205 = arith.divf %203, %204 : vector<1x128xf32>
    %206 = vector.extract_strided_slice %193 {offsets = [0, 256], sizes = [1, 128], strides = [1, 1]} : vector<1x512xf32> to vector<1x128xf32>
    %207 = math.tanh %206 : vector<1x128xf32>
    %208 = vector.extract_strided_slice %193 {offsets = [0, 384], sizes = [1, 128], strides = [1, 1]} : vector<1x512xf32> to vector<1x128xf32>
    %209 = arith.negf %208 : vector<1x128xf32>
    %210 = math.exp %209 : vector<1x128xf32>
    %cst_42 = arith.constant 1.000000e+00 : f32
    %211 = vector.broadcast %cst_42 : f32 to vector<1x128xf32>
    %212 = arith.addf %211, %210 : vector<1x128xf32>
    %213 = arith.divf %211, %212 : vector<1x128xf32>
    %214 = arith.mulf %205, %180 : vector<1x128xf32>
    %215 = arith.mulf %199, %207 : vector<1x128xf32>
    %216 = arith.addf %214, %215 : vector<1x128xf32>
    %217 = math.tanh %216 : vector<1x128xf32>
    %218 = arith.mulf %213, %217 : vector<1x128xf32>
    %219 = arith.index_cast %arg0 : i32 to index
    %c6_43 = arith.constant 6 : index
    %220 = memref.load %arg1[%219, %c6_43] : memref<4x8xi32, #tpu.memory_space<smem>>
    %221 = arith.index_cast %220 : i32 to index
    %c0_44 = arith.constant 0 : index
    %222 = vector.load %arg2[%221, %c0_44] : memref<16x512xf32, #tpu.memory_space<vmem>>, vector<1x512xf32>
    %223 = arith.index_cast %arg0 : i32 to index
    %c1_45 = arith.constant 1 : index
    %224 = memref.load %arg1[%223, %c1_45] : memref<4x8xi32, #tpu.memory_space<smem>>
    %225 = arith.index_cast %224 : i32 to index
    %c0_46 = arith.constant 0 : index
    %226 = vector.load %arg3[%225, %c0_46] : memref<16x512xf32, #tpu.memory_space<vmem>>, vector<1x512xf32>
    %227 = arith.addf %222, %226 : vector<1x512xf32>
    %cst_47 = arith.constant dense<0.000000e+00> : vector<1x512xf32>
    %228 = tpu.matmul %218, %0, %cst_47 {dimension_numbers = #tpu.dot_dimension_numbers<[1], [0], [0], [1], [0, 0, 1, 1], [], []>} : vector<1x128xf32>, vector<128x512xf32>, vector<1x512xf32> -> vector<1x512xf32>
    %229 = arith.addf %227, %228 : vector<1x512xf32>
    %230 = vector.extract_strided_slice %229 {offsets = [0, 0], sizes = [1, 128], strides = [1, 1]} : vector<1x512xf32> to vector<1x128xf32>
    %231 = arith.negf %230 : vector<1x128xf32>
    %232 = math.exp %231 : vector<1x128xf32>
    %cst_48 = arith.constant 1.000000e+00 : f32
    %233 = vector.broadcast %cst_48 : f32 to vector<1x128xf32>
    %234 = arith.addf %233, %232 : vector<1x128xf32>
    %235 = arith.divf %233, %234 : vector<1x128xf32>
    %236 = vector.extract_strided_slice %229 {offsets = [0, 128], sizes = [1, 128], strides = [1, 1]} : vector<1x512xf32> to vector<1x128xf32>
    %237 = arith.negf %236 : vector<1x128xf32>
    %238 = math.exp %237 : vector<1x128xf32>
    %cst_49 = arith.constant 1.000000e+00 : f32
    %239 = vector.broadcast %cst_49 : f32 to vector<1x128xf32>
    %240 = arith.addf %239, %238 : vector<1x128xf32>
    %241 = arith.divf %239, %240 : vector<1x128xf32>
    %242 = vector.extract_strided_slice %229 {offsets = [0, 256], sizes = [1, 128], strides = [1, 1]} : vector<1x512xf32> to vector<1x128xf32>
    %243 = math.tanh %242 : vector<1x128xf32>
    %244 = vector.extract_strided_slice %229 {offsets = [0, 384], sizes = [1, 128], strides = [1, 1]} : vector<1x512xf32> to vector<1x128xf32>
    %245 = arith.negf %244 : vector<1x128xf32>
    %246 = math.exp %245 : vector<1x128xf32>
    %cst_50 = arith.constant 1.000000e+00 : f32
    %247 = vector.broadcast %cst_50 : f32 to vector<1x128xf32>
    %248 = arith.addf %247, %246 : vector<1x128xf32>
    %249 = arith.divf %247, %248 : vector<1x128xf32>
    %250 = arith.mulf %241, %216 : vector<1x128xf32>
    %251 = arith.mulf %235, %243 : vector<1x128xf32>
    %252 = arith.addf %250, %251 : vector<1x128xf32>
    %253 = math.tanh %252 : vector<1x128xf32>
    %254 = arith.mulf %249, %253 : vector<1x128xf32>
    %255 = arith.index_cast %arg0 : i32 to index
    %c7_51 = arith.constant 7 : index
    %256 = memref.load %arg1[%255, %c7_51] : memref<4x8xi32, #tpu.memory_space<smem>>
    %257 = arith.index_cast %256 : i32 to index
    %c0_52 = arith.constant 0 : index
    %258 = vector.load %arg2[%257, %c0_52] : memref<16x512xf32, #tpu.memory_space<vmem>>, vector<1x512xf32>
    %259 = arith.index_cast %arg0 : i32 to index
    %c0_53 = arith.constant 0 : index
    %260 = memref.load %arg1[%259, %c0_53] : memref<4x8xi32, #tpu.memory_space<smem>>
    %261 = arith.index_cast %260 : i32 to index
    %c0_54 = arith.constant 0 : index
    %262 = vector.load %arg3[%261, %c0_54] : memref<16x512xf32, #tpu.memory_space<vmem>>, vector<1x512xf32>
    %263 = arith.addf %258, %262 : vector<1x512xf32>
    %cst_55 = arith.constant dense<0.000000e+00> : vector<1x512xf32>
    %264 = tpu.matmul %254, %0, %cst_55 {dimension_numbers = #tpu.dot_dimension_numbers<[1], [0], [0], [1], [0, 0, 1, 1], [], []>} : vector<1x128xf32>, vector<128x512xf32>, vector<1x512xf32> -> vector<1x512xf32>
    %265 = arith.addf %263, %264 : vector<1x512xf32>
    %266 = vector.extract_strided_slice %265 {offsets = [0, 0], sizes = [1, 128], strides = [1, 1]} : vector<1x512xf32> to vector<1x128xf32>
    %267 = arith.negf %266 : vector<1x128xf32>
    %268 = math.exp %267 : vector<1x128xf32>
    %cst_56 = arith.constant 1.000000e+00 : f32
    %269 = vector.broadcast %cst_56 : f32 to vector<1x128xf32>
    %270 = arith.addf %269, %268 : vector<1x128xf32>
    %271 = arith.divf %269, %270 : vector<1x128xf32>
    %272 = vector.extract_strided_slice %265 {offsets = [0, 128], sizes = [1, 128], strides = [1, 1]} : vector<1x512xf32> to vector<1x128xf32>
    %273 = arith.negf %272 : vector<1x128xf32>
    %274 = math.exp %273 : vector<1x128xf32>
    %cst_57 = arith.constant 1.000000e+00 : f32
    %275 = vector.broadcast %cst_57 : f32 to vector<1x128xf32>
    %276 = arith.addf %275, %274 : vector<1x128xf32>
    %277 = arith.divf %275, %276 : vector<1x128xf32>
    %278 = vector.extract_strided_slice %265 {offsets = [0, 256], sizes = [1, 128], strides = [1, 1]} : vector<1x512xf32> to vector<1x128xf32>
    %279 = math.tanh %278 : vector<1x128xf32>
    %280 = vector.extract_strided_slice %265 {offsets = [0, 384], sizes = [1, 128], strides = [1, 1]} : vector<1x512xf32> to vector<1x128xf32>
    %281 = arith.negf %280 : vector<1x128xf32>
    %282 = math.exp %281 : vector<1x128xf32>
    %cst_58 = arith.constant 1.000000e+00 : f32
    %283 = vector.broadcast %cst_58 : f32 to vector<1x128xf32>
    %284 = arith.addf %283, %282 : vector<1x128xf32>
    %285 = arith.divf %283, %284 : vector<1x128xf32>
    %286 = arith.mulf %277, %252 : vector<1x128xf32>
    %287 = arith.mulf %271, %279 : vector<1x128xf32>
    %288 = arith.addf %286, %287 : vector<1x128xf32>
    %289 = math.tanh %288 : vector<1x128xf32>
    %290 = arith.mulf %285, %289 : vector<1x128xf32>
    %291 = tpu.concatenate %38, %74, %110, %146, %182, %218, %254, %290 in 0 : vector<1x128xf32>, vector<1x128xf32>, vector<1x128xf32>, vector<1x128xf32>, vector<1x128xf32>, vector<1x128xf32>, vector<1x128xf32>, vector<1x128xf32> -> vector<8x128xf32>
    %292 = tpu.concatenate %290, %254, %218, %182, %146, %110, %74, %38 in 0 : vector<1x128xf32>, vector<1x128xf32>, vector<1x128xf32>, vector<1x128xf32>, vector<1x128xf32>, vector<1x128xf32>, vector<1x128xf32>, vector<1x128xf32> -> vector<8x128xf32>
    %c0_59 = arith.constant 0 : index
    %c0_60 = arith.constant 0 : index
    %293 = vector.load %arg5[%c0_59, %c0_60] : memref<128x128xf32, #tpu.memory_space<vmem>>, vector<128x128xf32>
    %cst_61 = arith.constant dense<0.000000e+00> : vector<8x128xf32>
    %294 = tpu.matmul %291, %293, %cst_61 {dimension_numbers = #tpu.dot_dimension_numbers<[1], [0], [0], [1], [0, 0, 1, 1], [], []>} : vector<8x128xf32>, vector<128x128xf32>, vector<8x128xf32> -> vector<8x128xf32>
    %c0_62 = arith.constant 0 : index
    %c0_63 = arith.constant 0 : index
    %295 = vector.load %arg6[%c0_62, %c0_63] : memref<128x128xf32, #tpu.memory_space<vmem>>, vector<128x128xf32>
    %cst_64 = arith.constant dense<0.000000e+00> : vector<8x128xf32>
    %296 = tpu.matmul %292, %295, %cst_64 {dimension_numbers = #tpu.dot_dimension_numbers<[1], [0], [0], [1], [0, 0, 1, 1], [], []>} : vector<8x128xf32>, vector<128x128xf32>, vector<8x128xf32> -> vector<8x128xf32>
    %297 = arith.addf %294, %296 : vector<8x128xf32>
    %c0_65 = arith.constant 0 : index
    %c0_66 = arith.constant 0 : index
    %298 = vector.load %arg7[%c0_65, %c0_66] : memref<1x128xf32, #tpu.memory_space<vmem>>, vector<1x128xf32>
    %299 = vector.broadcast %298 : vector<1x128xf32> to vector<8x128xf32>
    %300 = arith.addf %297, %299 : vector<8x128xf32>
    %cst_67 = arith.constant dense<0xFF800000> : vector<8xf32>
    %301 = vector.multi_reduction <maximumf>, %300, %cst_67 [1] : vector<8x128xf32> to vector<8xf32>
    %302 = vector.shape_cast %301 : vector<8xf32> to vector<8x1xf32>
    %303 = vector.broadcast %302 : vector<8x1xf32> to vector<8x128xf32>
    %304 = arith.subf %300, %303 : vector<8x128xf32>
    %305 = math.exp %304 : vector<8x128xf32>
    %cst_68 = arith.constant dense<0.000000e+00> : vector<8xf32>
    %306 = vector.multi_reduction <add>, %305, %cst_68 [1] : vector<8x128xf32> to vector<8xf32>
    %307 = vector.shape_cast %306 : vector<8xf32> to vector<8x1xf32>
    %308 = math.log %307 : vector<8x1xf32>
    %309 = vector.broadcast %308 : vector<8x1xf32> to vector<8x128xf32>
    %310 = arith.subf %304, %309 : vector<8x128xf32>
    %c0_69 = arith.constant 0 : index
    %c0_70 = arith.constant 0 : index
    %c0_71 = arith.constant 0 : index
    %311 = vector.load %arg8[%c0_69, %c0_70, %c0_71] : memref<1x8x128xf32, #tpu.memory_space<vmem>>, vector<1x8x128xf32>
    %312 = vector.shape_cast %311 : vector<1x8x128xf32> to vector<8x128xf32>
    %313 = vector.shape_cast %310 : vector<8x128xf32> to vector<1x8x128xf32>
    tpu.vector_store %arg8[%c0_69, %c0_70, %c0_71], %313 {strides = array<i32>} : memref<1x8x128xf32, #tpu.memory_space<vmem>>, vector<1x8x128xf32>,
    return
  }
  func.func @transform_0(%arg0: i32, %arg1: memref<4x8xi32, #tpu.memory_space<smem>>) -> (i32, i32) {
    %c0_i32 = arith.constant 0 : i32
    %c0_i32_0 = arith.constant 0 : i32
    %c0_i32_1 = arith.constant 0 : i32
    return %c0_i32, %c0_i32_0 : i32, i32
  }
  func.func @transform_1(%arg0: i32, %arg1: memref<4x8xi32, #tpu.memory_space<smem>>) -> (i32, i32) {
    %c0_i32 = arith.constant 0 : i32
    %c0_i32_0 = arith.constant 0 : i32
    %c0_i32_1 = arith.constant 0 : i32
    return %c0_i32, %c0_i32_0 : i32, i32
  }
  func.func @transform_2(%arg0: i32, %arg1: memref<4x8xi32, #tpu.memory_space<smem>>) -> (i32, i32) {
    %c0_i32 = arith.constant 0 : i32
    %c0_i32_0 = arith.constant 0 : i32
    %c0_i32_1 = arith.constant 0 : i32
    return %c0_i32, %c0_i32_0 : i32, i32
  }
  func.func @transform_3(%arg0: i32, %arg1: memref<4x8xi32, #tpu.memory_space<smem>>) -> (i32, i32) {
    %c0_i32 = arith.constant 0 : i32
    %c0_i32_0 = arith.constant 0 : i32
    %c0_i32_1 = arith.constant 0 : i32
    return %c0_i32, %c0_i32_0 : i32, i32
  }
  func.func @transform_4(%arg0: i32, %arg1: memref<4x8xi32, #tpu.memory_space<smem>>) -> (i32, i32) {
    %c0_i32 = arith.constant 0 : i32
    %c0_i32_0 = arith.constant 0 : i32
    %c0_i32_1 = arith.constant 0 : i32
    return %c0_i32, %c0_i32_0 : i32, i32
  }
  func.func @transform_5(%arg0: i32, %arg1: memref<4x8xi32, #tpu.memory_space<smem>>) -> (i32, i32) {
    %c0_i32 = arith.constant 0 : i32
    %c0_i32_0 = arith.constant 0 : i32
    %c0_i32_1 = arith.constant 0 : i32
    return %c0_i32, %c0_i32_0 : i32, i32
  }
  func.func @transform_6(%arg0: i32, %arg1: memref<4x8xi32, #tpu.memory_space<smem>>) -> (i32, i32, i32) {
    %c0_i32 = arith.constant 0 : i32
    %c0_i32_0 = arith.constant 0 : i32
    %c0_i32_1 = arith.constant 0 : i32
    return %arg0, %c0_i32, %c0_i32_0 : i32, i32, i32
  }
}

</mosaic_0001>

<llo_original>
// kernel: tpu_custom_call.1
$region0: #{tpu_custom_call.1}
  #allocation0 [shape = 'u32[]', space=smem, size = 0x4, offset = 0x4, fixed_abs, tag = 'smem constant byte address 0x4 - core index']
  #allocation1 [shape = 'u32[144,128]{1,0:T(1,128)}', space=vmem, size = 0x12000, scoped, tag = 'internal scratch']
  #allocation2 [shape = 's32[1]{0}', space=sflag, size = 0x4, scoped, tag = 'scoped memory for tpu_custom_call.1']
  #allocation3 [shape = 'u8[2048]{0}', space=smem, size = 0x800, scoped, tag = 'prefetched SMEM operand 0']
  %s0 = inlined_call_operand.hbm [shape: s32[4,8], index: 0, kind: input, shape index: {}]
  %s1 = inlined_call_operand.hbm [shape: f32[16,512], index: 1, kind: input, shape index: {}]
  %s2 = inlined_call_operand.hbm [shape: f32[16,512], index: 2, kind: input, shape index: {}]
  %s3 = inlined_call_operand.hbm [shape: f32[128,512], index: 3, kind: input, shape index: {}]
  %s4 = inlined_call_operand.hbm [shape: f32[128,128], index: 4, kind: input, shape index: {}]
  %s5 = inlined_call_operand.hbm [shape: f32[128,128], index: 5, kind: input, shape index: {}]
  %s6 = inlined_call_operand.vmem [shape: f32[1,128], index: 6, kind: input, shape index: {}]
  %s7 = inlined_call_operand.hbm [shape: f32[4,8,128], index: 7, kind: output, shape index: {}]
  %s8 = sld [smem:[#allocation0]]
  $region77: #{tpu_custom_call.1} parent=0
    _
  %s10 = ssub.s32 1, %s8
  %s11 = scalar_select 0, %s10, %s8
  %13 = dma.hbm_to_smem %s0, 64, [#allocation3], [#allocation2]
  %14 = dma.done [#allocation2], 64
  %15 = sfence
  $region1: #{tpu_custom_call.1} parent=0
    #allocation4 [shape = 'u8[32768]{0}', space=vmem, size = 0x8000, scoped, tag = 'input window, operand 1, single buffered']
    #allocation5 [shape = 's32[2]{0}', space=sflag, size = 0x8, scoped, tag = 'scoped memory for tpu_custom_call.1']
    #allocation6 [shape = 's32[2]{0}', space=sflag, size = 0x8, scoped, tag = 'scoped memory for tpu_custom_call.1']
    #allocation7 [shape = 'u8[32768]{0}', space=vmem, size = 0x8000, scoped, tag = 'input window, operand 2, single buffered']
    #allocation8 [shape = 's32[1]{0}', space=sflag, size = 0x4, scoped, tag = 'scoped memory for tpu_custom_call.1']
    #allocation9 [shape = 'u8[262144]{0}', space=vmem, size = 0x40000, scoped, tag = 'input window, operand 3, single buffered']
    #allocation10 [shape = 'u8[65536]{0}', space=vmem, size = 0x10000, scoped, tag = 'input window, operand 4, single buffered']
    #allocation11 [shape = 's32[1]{0}', space=sflag, size = 0x4, scoped, tag = 'scoped memory for tpu_custom_call.1']
    #allocation12 [shape = 'u8[65536]{0}', space=vmem, size = 0x10000, scoped, tag = 'input window, operand 5, single buffered']
    #allocation13 [shape = 'u8[8192]{0}', space=vmem, size = 0x2000, scoped, tag = 'output window, operand 0']
    %16 = vsyncpa [#allocation5], 0
    %17 = vsyncpa [#allocation8], 0
    %18 = vsyncpa [#allocation11], 0
    %19 = vsyncpa [#allocation6], 0
    %s20 = scalar_lea.sflag [#allocation6], 1
    %21 = vsyncpa %s20, 0
    loop: start=0, step=1, limit=6
    $region2: #{tpu_custom_call.1} parent=1 // loop_pre_header
      _
    $region3: #{tpu_custom_call.1} parent=1 // loop_header
      %s23 = sphi 0, %s27
      %p24 = scmp.ge.s32.totalorder %s23, 6
      %s31 = sphi 0, %s31
      %s33 = sphi 0, %s31
      %s34 = sphi 0, %s33
      %s48 = sphi 0, %s34
      %s52 = sphi 0, %s52
      %s54 = sphi 0, %s52
      %s55 = sphi 0, %s54
      %s69 = sphi 0, %s55
      %s73 = sphi 0, %s73
      %s75 = sphi 0, %s73
      %s76 = sphi 0, %s75
      %s90 = sphi 0, %s76
      %s94 = sphi 0, %s94
      %s96 = sphi 0, %s94
      %s97 = sphi 0, %s96
      %s111 = sphi 0, %s97
      %s115 = sphi 0, %s115
      %s117 = sphi 0, %s115
      %s118 = sphi 0, %s117
      %s132 = sphi 0, %s118
      %s136 = sphi 0, %s136
      %s138 = sphi 0, %s136
      %s139 = sphi 0, %s138
      %s153 = sphi 0, %s139
      %s159 = sphi 0, %s161
      %s162 = sphi 0, %s159
      %s163 = sphi 0, %s162
      %s179 = sphi 0, %s163
    $region4: #{tpu_custom_call.1} parent=1 // loop_header_branch
      %26 = sbr.rel (%p24) target = $region8
    $region5: #{tpu_custom_call.1} parent=1 // loop_body
      %s28 = ssub.s32 %s23, 1
      %s29 = ssub.s32 %s23, 2
      %s30 = sadd.s32 %s23, 1
      %s32 = sadd.s32 %s31, 1
      %p35 = scmp.eq.s32.totalorder %s23, 3
      %p36 = scmp.ne.s32.totalorder %s31, %s33
      %p37 = scmp.eq.s32.totalorder %s23, 0
      %p38 = por %p36, %p37
      %p39 = scmp.ne.s32.totalorder %s31, %s33
      %p40 = scmp.eq.s32.totalorder %s28, 3
      %p41 = por %p39, %p40
      %p42 = scmp.ne.s32.totalorder %s33, %s34
      %p43 = scmp.eq.s32.totalorder %s28, 0
      %p44 = por %p42, %p43
      %p45 = scmp.ne.s32.totalorder %s33, %s34
      %p46 = scmp.eq.s32.totalorder %s29, 3
      %p47 = por %p45, %p46
      %p49 = scmp.ne.s32.totalorder %s34, %s48
      %p50 = scmp.eq.s32.totalorder %s29, 0
      %p51 = por %p49, %p50
      %s53 = sadd.s32 %s52, 1
      %p56 = scmp.eq.s32.totalorder %s23, 3
      %p57 = scmp.ne.s32.totalorder %s52, %s54
      %p58 = scmp.eq.s32.totalorder %s23, 0
      %p59 = por %p57, %p58
      %p60 = scmp.ne.s32.totalorder %s52, %s54
      %p61 = scmp.eq.s32.totalorder %s28, 3
      %p62 = por %p60, %p61
      %p63 = scmp.ne.s32.totalorder %s54, %s55
      %p64 = scmp.eq.s32.totalorder %s28, 0
      %p65 = por %p63, %p64
      %p66 = scmp.ne.s32.totalorder %s54, %s55
      %p67 = scmp.eq.s32.totalorder %s29, 3
      %p68 = por %p66, %p67
      %p70 = scmp.ne.s32.totalorder %s55, %s69
      %p71 = scmp.eq.s32.totalorder %s29, 0
      %p72 = por %p70, %p71
      %s74 = sadd.s32 %s73, 1
      %p77 = scmp.eq.s32.totalorder %s23, 3
      %p78 = scmp.ne.s32.totalorder %s73, %s75
      %p79 = scmp.eq.s32.totalorder %s23, 0
      %p80 = por %p78, %p79
      %p81 = scmp.ne.s32.totalorder %s73, %s75
      %p82 = scmp.eq.s32.totalorder %s28, 3
      %p83 = por %p81, %p82
      %p84 = scmp.ne.s32.totalorder %s75, %s76
      %p85 = scmp.eq.s32.totalorder %s28, 0
      %p86 = por %p84, %p85
      %p87 = scmp.ne.s32.totalorder %s75, %s76
      %p88 = scmp.eq.s32.totalorder %s29, 3
      %p89 = por %p87, %p88
      %p91 = scmp.ne.s32.totalorder %s76, %s90
      %p92 = scmp.eq.s32.totalorder %s29, 0
      %p93 = por %p91, %p92
      %s95 = sadd.s32 %s94, 1
      %p98 = scmp.eq.s32.totalorder %s23, 3
      %p99 = scmp.ne.s32.totalorder %s94, %s96
      %p100 = scmp.eq.s32.totalorder %s23, 0
      %p101 = por %p99, %p100
      %p102 = scmp.ne.s32.totalorder %s94, %s96
      %p103 = scmp.eq.s32.totalorder %s28, 3
      %p104 = por %p102, %p103
      %p105 = scmp.ne.s32.totalorder %s96, %s97
      %p106 = scmp.eq.s32.totalorder %s28, 0
      %p107 = por %p105, %p106
      %p108 = scmp.ne.s32.totalorder %s96, %s97
      %p109 = scmp.eq.s32.totalorder %s29, 3
      %p110 = por %p108, %p109
      %p112 = scmp.ne.s32.totalorder %s97, %s111
      %p113 = scmp.eq.s32.totalorder %s29, 0
      %p114 = por %p112, %p113
      %s116 = sadd.s32 %s115, 1
      %p119 = scmp.eq.s32.totalorder %s23, 3
      %p120 = scmp.ne.s32.totalorder %s115, %s117
      %p121 = scmp.eq.s32.totalorder %s23, 0
      %p122 = por %p120, %p121
      %p123 = scmp.ne.s32.totalorder %s115, %s117
      %p124 = scmp.eq.s32.totalorder %s28, 3
      %p125 = por %p123, %p124
      %p126 = scmp.ne.s32.totalorder %s117, %s118
      %p127 = scmp.eq.s32.totalorder %s28, 0
      %p128 = por %p126, %p127
      %p129 = scmp.ne.s32.totalorder %s117, %s118
      %p130 = scmp.eq.s32.totalorder %s29, 3
      %p131 = por %p129, %p130
      %p133 = scmp.ne.s32.totalorder %s118, %s132
      %p134 = scmp.eq.s32.totalorder %s29, 0
      %p135 = por %p133, %p134
      %s137 = sadd.s32 %s136, 1
      %p140 = scmp.eq.s32.totalorder %s23, 3
      %p141 = scmp.ne.s32.totalorder %s136, %s138
      %p142 = scmp.eq.s32.totalorder %s23, 0
      %p143 = por %p141, %p142
      %p144 = scmp.ne.s32.totalorder %s136, %s138
      %p145 = scmp.eq.s32.totalorder %s28, 3
      %p146 = por %p144, %p145
      %p147 = scmp.ne.s32.totalorder %s138, %s139
      %p148 = scmp.eq.s32.totalorder %s28, 0
      %p149 = por %p147, %p148
      %p150 = scmp.ne.s32.totalorder %s138, %s139
      %p151 = scmp.eq.s32.totalorder %s29, 3
      %p152 = por %p150, %p151
      %p154 = scmp.ne.s32.totalorder %s139, %s153
      %p155 = scmp.eq.s32.totalorder %s29, 0
      %p156 = por %p154, %p155
      %s157 = ssub.s32 %s23, %s30
      %p158 = scmp.eq.s32.totalorder %s157, 0
      %s160 = sadd.s32 %s159, 1
      %s161 = scalar_select %p158, %s159, %s160
      %p164 = pneg %p158
      %p165 = scmp.eq.s32.totalorder %s23, 3
      %p166 = por %p164, %p165
      %p167 = scmp.ne.s32.totalorder %s159, %s162
      %p168 = scmp.eq.s32.totalorder %s23, 0
      %p169 = por %p167, %p168
      %p170 = scmp.ne.s32.totalorder %s159, %s162
      %p171 = scmp.eq.s32.totalorder %s28, 3
      %p172 = por %p170, %p171
      %p173 = scmp.ne.s32.totalorder %s162, %s163
      %p174 = scmp.eq.s32.totalorder %s28, 0
      %p175 = por %p173, %p174
      %p176 = scmp.ne.s32.totalorder %s162, %s163
      %p177 = scmp.eq.s32.totalorder %s29, 3
      %p178 = por %p176, %p177
      %p180 = scmp.ne.s32.totalorder %s163, %s179
      %p181 = scmp.eq.s32.totalorder %s29, 0
      %p182 = por %p180, %p181
      %p183 = scmp.le.s32.totalorder 1, %s23
      %p184 = scmp.lt.s32.totalorder %s23, 5
      %p185 = pnand %p183, %p184
      %p186 = pneg %p185
      // Predicated region
      $region9: #{tpu_custom_call.1} parent=5 // pred_check
        _
      $region10: #{tpu_custom_call.1} parent=5 // pred_check_branch
        %188 = sbr.rel (%p185) target = $region12
      $region11: #{tpu_custom_call.1} parent=5 // pred_region
        %s189 = ssub.s32 %s23, 1
        // Predicated region
        $region13: #{tpu_custom_call.1} parent=11 // pred_check
          %p190 = pneg %p44
        $region14: #{tpu_custom_call.1} parent=11 // pred_check_branch
          %192 = sbr.rel (%p190) target = $region16
        $region15: #{tpu_custom_call.1} parent=11 // pred_region
          %s194 = ssub.s32 1024, 1024
          %195 = vsyncadd [#allocation5], %s194
          %s196 = sshll.u32 [#allocation4], 4
          %s197 = int_to_ptr.vmem [resolvable:$true] %s196
          %202 = dma.hbm_to_vmem [thread:$0]  %s1, 1024, %s197, [#allocation5], 512, 512, 32
        $region16: #{tpu_custom_call.1} parent=11 // pred_fallthru
          _
        // Predicated region
        $region17: #{tpu_custom_call.1} parent=11 // pred_check
          %p203 = pneg %p65
        $region18: #{tpu_custom_call.1} parent=11 // pred_check_branch
          %205 = sbr.rel (%p203) target = $region20
        $region19: #{tpu_custom_call.1} parent=11 // pred_region
          %s207 = ssub.s32 1024, 1024
          %208 = vsyncadd [#allocation8], %s207
          %s209 = sshll.u32 [#allocation7], 4
          %s210 = int_to_ptr.vmem [resolvable:$true] %s209
          %215 = dma.hbm_to_vmem [thread:$0]  %s2, 1024, %s210, [#allocation8], 512, 512, 32
        $region20: #{tpu_custom_call.1} parent=11 // pred_fallthru
          _
        // Predicated region
        $region21: #{tpu_custom_call.1} parent=11 // pred_check
          %p216 = pneg %p86
        $region22: #{tpu_custom_call.1} parent=11 // pred_check_branch
          %218 = sbr.rel (%p216) target = $region24
        $region23: #{tpu_custom_call.1} parent=11 // pred_region
          %s220 = ssub.s32 8192, 8192
          %221 = vsyncadd [#allocation8], %s220
          %s222 = sshll.u32 [#allocation9], 4
          %s223 = int_to_ptr.vmem [resolvable:$true] %s222
          %228 = dma.hbm_to_vmem [thread:$0]  %s3, 8192, %s223, [#allocation8], 512, 512, 32
        $region24: #{tpu_custom_call.1} parent=11 // pred_fallthru
          _
        // Predicated region
        $region25: #{tpu_custom_call.1} parent=11 // pred_check
          %p229 = pneg %p107
        $region26: #{tpu_custom_call.1} parent=11 // pred_check_branch
          %231 = sbr.rel (%p229) target = $region28
        $region27: #{tpu_custom_call.1} parent=11 // pred_region
          %s233 = ssub.s32 2048, 2048
          %234 = vsyncadd [#allocation11], %s233
          %s235 = sshll.u32 [#allocation10], 4
          %s236 = int_to_ptr.vmem [resolvable:$true] %s235
          %241 = dma.hbm_to_vmem [thread:$0]  %s4, 2048, %s236, [#allocation11], 128, 128, 8
        $region28: #{tpu_custom_call.1} parent=11 // pred_fallthru
          _
        // Predicated region
        $region29: #{tpu_custom_call.1} parent=11 // pred_check
          %p242 = pneg %p128
        $region30: #{tpu_custom_call.1} parent=11 // pred_check_branch
          %244 = sbr.rel (%p242) target = $region32
        $region31: #{tpu_custom_call.1} parent=11 // pred_region
          %s246 = ssub.s32 2048, 2048
          %247 = vsyncadd [#allocation11], %s246
          %s248 = sshll.u32 [#allocation12], 4
          %s249 = int_to_ptr.vmem [resolvable:$true] %s248
          %254 = dma.hbm_to_vmem [thread:$0]  %s5, 2048, %s249, [#allocation11], 128, 128, 8
        $region32: #{tpu_custom_call.1} parent=11 // pred_fallthru
          _
        // Predicated region
        $region33: #{tpu_custom_call.1} parent=11 // pred_check
          %p255 = pneg %p149
        $region34: #{tpu_custom_call.1} parent=11 // pred_check_branch
          %257 = sbr.rel (%p255) target = $region36
        $region35: #{tpu_custom_call.1} parent=11 // pred_region
          _
        $region36: #{tpu_custom_call.1} parent=11 // pred_fallthru
          _
      $region12: #{tpu_custom_call.1} parent=5 // pred_fallthru
        _
      %p258 = scmp.lt.s32.totalorder %s23, 4
      // Predicated region
      $region37: #{tpu_custom_call.1} parent=5 // pred_check
        %p259 = pneg %p258
      $region38: #{tpu_custom_call.1} parent=5 // pred_check_branch
        %261 = sbr.rel (%p259) target = $region40
      $region39: #{tpu_custom_call.1} parent=5 // pred_region
        _
      $region40: #{tpu_custom_call.1} parent=5 // pred_fallthru
        _
      %p262 = scmp.le.s32.totalorder 1, %s23
      %p263 = scmp.lt.s32.totalorder %s23, 5
      %p264 = pnand %p262, %p263
      %p265 = pneg %p264
      // Predicated region
      $region41: #{tpu_custom_call.1} parent=5 // pred_check
        _
      $region42: #{tpu_custom_call.1} parent=5 // pred_check_branch
        %267 = sbr.rel (%p264) target = $region44
      $region43: #{tpu_custom_call.1} parent=5 // pred_region
        %s268 = ssub.s32 %s23, 1
        // Predicated region
        $region45: #{tpu_custom_call.1} parent=43 // pred_check
          %p269 = pneg %p44
        $region46: #{tpu_custom_call.1} parent=43 // pred_check_branch
          %271 = sbr.rel (%p269) target = $region48
        $region47: #{tpu_custom_call.1} parent=43 // pred_region
          %272 = dma.done [#allocation5], 1024
        $region48: #{tpu_custom_call.1} parent=43 // pred_fallthru
          _
        // Predicated region
        $region49: #{tpu_custom_call.1} parent=43 // pred_check
          %p273 = pneg %p65
        $region50: #{tpu_custom_call.1} parent=43 // pred_check_branch
          %275 = sbr.rel (%p273) target = $region52
        $region51: #{tpu_custom_call.1} parent=43 // pred_region
          %276 = dma.done [#allocation8], 1024
        $region52: #{tpu_custom_call.1} parent=43 // pred_fallthru
          _
        // Predicated region
        $region53: #{tpu_custom_call.1} parent=43 // pred_check
          %p277 = pneg %p86
        $region54: #{tpu_custom_call.1} parent=43 // pred_check_branch
          %279 = sbr.rel (%p277) target = $region56
        $region55: #{tpu_custom_call.1} parent=43 // pred_region
          %280 = dma.done [#allocation8], 8192
        $region56: #{tpu_custom_call.1} parent=43 // pred_fallthru
          _
        // Predicated region
        $region57: #{tpu_custom_call.1} parent=43 // pred_check
          %p281 = pneg %p107
        $region58: #{tpu_custom_call.1} parent=43 // pred_check_branch
          %283 = sbr.rel (%p281) target = $region60
        $region59: #{tpu_custom_call.1} parent=43 // pred_region
          %284 = dma.done [#allocation11], 2048
        $region60: #{tpu_custom_call.1} parent=43 // pred_fallthru
          _
        // Predicated region
        $region61: #{tpu_custom_call.1} parent=43 // pred_check
          %p285 = pneg %p128
        $region62: #{tpu_custom_call.1} parent=43 // pred_check_branch
          %287 = sbr.rel (%p285) target = $region64
        $region63: #{tpu_custom_call.1} parent=43 // pred_region
          %288 = dma.done [#allocation11], 2048
        $region64: #{tpu_custom_call.1} parent=43 // pred_fallthru
          _
        %p289 = pneg %p44
        %p290 = pneg %p41
        %p291 = pneg %p65
        %p292 = pneg %p62
        %p293 = pneg %p86
        %p294 = pneg %p83
        %p295 = pneg %p107
        %p296 = pneg %p104
        %p297 = pneg %p128
        %p298 = pneg %p125
        %p299 = pneg %p149
        %p300 = pneg %p146
        %p301 = pneg %p175
        %p302 = pneg %p172
        %s303 = sand.u32 %s162, 1
        %s304 = scalar_lea.sflag [#allocation6], %s303
        %s305 = sand.u32 %s162, 1
        %s306 = smul.addr %s305, 8
        %s307 = scalar_lea.vmem [#allocation13], %s306
        %v308 = vld [vmem:[#allocation9] sm:$0xff]
        %v309 = vld [vmem:[#allocation9 + $0x8] sm:$0xff]
        %v310 = vld [vmem:[#allocation9 + $0x10] sm:$0xff]
        %v311 = vld [vmem:[#allocation9 + $0x18] sm:$0xff]
        %v312 = vld [vmem:[#allocation9 + $0x20] sm:$0xff]
        %v313 = vld [vmem:[#allocation9 + $0x28] sm:$0xff]
        %v314 = vld [vmem:[#allocation9 + $0x30] sm:$0xff]
        %v315 = vld [vmem:[#allocation9 + $0x38] sm:$0xff]
        %v316 = vld [vmem:[#allocation9 + $0x40] sm:$0xff]
        %v317 = vld [vmem:[#allocation9 + $0x48] sm:$0xff]
        %v318 = vld [vmem:[#allocation9 + $0x50] sm:$0xff]
        %v319 = vld [vmem:[#allocation9 + $0x58] sm:$0xff]
        %v320 = vld [vmem:[#allocation9 + $0x60] sm:$0xff]
        %v321 = vld [vmem:[#allocation9 + $0x68] sm:$0xff]
        %v322 = vld [vmem:[#allocation9 + $0x70] sm:$0xff]
        %v323 = vld [vmem:[#allocation9 + $0x78] sm:$0xff]
        %v324 = vld [vmem:[#allocation9 + $0x80] sm:$0xff]
        %v325 = vld [vmem:[#allocation9 + $0x88] sm:$0xff]
        %v326 = vld [vmem:[#allocation9 + $0x90] sm:$0xff]
        %v327 = vld [vmem:[#allocation9 + $0x98] sm:$0xff]
        %v328 = vld [vmem:[#allocation9 + $0xa0] sm:$0xff]
        %v329 = vld [vmem:[#allocation9 + $0xa8] sm:$0xff]
        %v330 = vld [vmem:[#allocation9 + $0xb0] sm:$0xff]
        %v331 = vld [vmem:[#allocation9 + $0xb8] sm:$0xff]
        %v332 = vld [vmem:[#allocation9 + $0xc0] sm:$0xff]
        %v333 = vld [vmem:[#allocation9 + $0xc8] sm:$0xff]
        %v334 = vld [vmem:[#allocation9 + $0xd0] sm:$0xff]
        %v335 = vld [vmem:[#allocation9 + $0xd8] sm:$0xff]
        %v336 = vld [vmem:[#allocation9 + $0xe0] sm:$0xff]
        %v337 = vld [vmem:[#allocation9 + $0xe8] sm:$0xff]
        %v338 = vld [vmem:[#allocation9 + $0xf0] sm:$0xff]
        %v339 = vld [vmem:[#allocation9 + $0xf8] sm:$0xff]
        %v340 = vld [vmem:[#allocation9 + $0x100] sm:$0xff]
        %v341 = vld [vmem:[#allocation9 + $0x108] sm:$0xff]
        %v342 = vld [vmem:[#allocation9 + $0x110] sm:$0xff]
        %v343 = vld [vmem:[#allocation9 + $0x118] sm:$0xff]
        %v344 = vld [vmem:[#allocation9 + $0x120] sm:$0xff]
        %v345 = vld [vmem:[#allocation9 + $0x128] sm:$0xff]
        %v346 = vld [vmem:[#allocation9 + $0x130] sm:$0xff]
        %v347 = vld [vmem:[#allocation9 + $0x138] sm:$0xff]
        %v348 = vld [vmem:[#allocation9 + $0x140] sm:$0xff]
        %v349 = vld [vmem:[#allocation9 + $0x148] sm:$0xff]
        %v350 = vld [vmem:[#allocation9 + $0x150] sm:$0xff]
        %v351 = vld [vmem:[#allocation9 + $0x158] sm:$0xff]
        %v352 = vld [vmem:[#allocation9 + $0x160] sm:$0xff]
        %v353 = vld [vmem:[#allocation9 + $0x168] sm:$0xff]
        %v354 = vld [vmem:[#allocation9 + $0x170] sm:$0xff]
        %v355 = vld [vmem:[#allocation9 + $0x178] sm:$0xff]
        %v356 = vld [vmem:[#allocation9 + $0x180] sm:$0xff]
        %v357 = vld [vmem:[#allocation9 + $0x188] sm:$0xff]
        %v358 = vld [vmem:[#allocation9 + $0x190] sm:$0xff]
        %v359 = vld [vmem:[#allocation9 + $0x198] sm:$0xff]
        %v360 = vld [vmem:[#allocation9 + $0x1a0] sm:$0xff]
        %v361 = vld [vmem:[#allocation9 + $0x1a8] sm:$0xff]
        %v362 = vld [vmem:[#allocation9 + $0x1b0] sm:$0xff]
        %v363 = vld [vmem:[#allocation9 + $0x1b8] sm:$0xff]
        %v364 = vld [vmem:[#allocation9 + $0x1c0] sm:$0xff]
        %v365 = vld [vmem:[#allocation9 + $0x1c8] sm:$0xff]
        %v366 = vld [vmem:[#allocation9 + $0x1d0] sm:$0xff]
        %v367 = vld [vmem:[#allocation9 + $0x1d8] sm:$0xff]
        %v368 = vld [vmem:[#allocation9 + $0x1e0] sm:$0xff]
        %v369 = vld [vmem:[#allocation9 + $0x1e8] sm:$0xff]
        %v370 = vld [vmem:[#allocation9 + $0x1f0] sm:$0xff]
        %v371 = vld [vmem:[#allocation9 + $0x1f8] sm:$0xff]
        %s372 = smul.u32 %s28, 128
        %s373 = sld [smem:[#allocation3 + %s372]]
        %s374 = sshra.s32 %s373, 3
        %s375 = sand.u32 %s373, 7
        %s376 = sshra.s32 %s373, 3
        %s377 = sand.u32 %s373, 7
        %s378 = smul.u32 %s374, 4
        %s379 = smul.u32 %s378, 8
        %s380 = sadd.s32 %s379, %s377
        %s381 = scalar_lea.vmem [#allocation4], %s380
        %v382 = vld [vmem:[%s381] ss:$8 sm:$0xf]
        %s383 = sadd.s32 %s372, 7
        %s384 = sld [smem:[#allocation3 + %s383]]
        %s385 = sshra.s32 %s384, 3
        %s386 = sand.u32 %s384, 7
        %s387 = sshra.s32 %s384, 3
        %s388 = sand.u32 %s384, 7
        %s389 = smul.u32 %s385, 4
        %s390 = smul.u32 %s389, 8
        %s391 = sadd.s32 %s390, %s388
        %s392 = scalar_lea.vmem [#allocation7], %s391
        %v393 = vld [vmem:[%s392] ss:$8 sm:$0xf]
        %v394 = vadd.f32 %v382, %v393
        %395 = vmatprep.subr.mxu0 %v369
        %396 = vmatpush1.msra.mxu0 %v368
        %397 = vmatprep.subr.mxu0 %v365
        %398 = vmatpush1.msra.mxu0 %v364
        %399 = vmatprep.subr.mxu0 %v361
        %400 = vmatpush1.msra.mxu0 %v360
        %401 = vmatprep.subr.mxu0 %v357
        %402 = vmatpush1.msra.mxu0 %v356
        %403 = vmatprep.subr.mxu0 %v353
        %404 = vmatpush1.msra.mxu0 %v352
        %405 = vmatprep.subr.mxu0 %v349
        %406 = vmatpush1.msra.mxu0 %v348
        %407 = vmatprep.subr.mxu0 %v345
        %408 = vmatpush1.msra.mxu0 %v344
        %409 = vmatprep.subr.mxu0 %v341
        %410 = vmatpush1.msra.mxu0 %v340
        %411 = vmatprep.subr.mxu0 %v337
        %412 = vmatpush1.msra.mxu0 %v336
        %413 = vmatprep.subr.mxu0 %v333
        %414 = vmatpush1.msra.mxu0 %v332
        %415 = vmatprep.subr.mxu0 %v329
        %416 = vmatpush1.msra.mxu0 %v328
        %417 = vmatprep.subr.mxu0 %v325
        %418 = vmatpush1.msra.mxu0 %v324
        %419 = vmatprep.subr.mxu0 %v321
        %420 = vmatpush1.msra.mxu0 %v320
        %421 = vmatprep.subr.mxu0 %v317
        %422 = vmatpush1.msra.mxu0 %v316
        %423 = vmatprep.subr.mxu0 %v313
        %424 = vmatpush1.msra.mxu0 %v312
        %425 = vmatprep.subr.mxu0 %v309
        %426 = vmatpush1.msra.mxu0 %v308
        %427 = vmatprep.subr.mxu0 0.0
        %428 = vmatpush2.msra.mxu0 0.0
        %429 = vmatprep.subr.mxu0 0.0
        %430 = vmatpush2.msra.mxu0 0.0
        %431 = vmatprep.subr.mxu0 0.0
        %432 = vmatpush2.msra.mxu0 0.0
        %433 = vmatprep.subr.mxu0 0.0
        %434 = vmatpush2.msra.mxu0 0.0
        %435 = vmatprep.subr.mxu0 0.0
        %436 = vmatpush2.msra.mxu0 0.0
        %437 = vmatprep.subr.mxu0 0.0
        %438 = vmatpush2.msra.mxu0 0.0
        %439 = vmatprep.subr.mxu0 0.0
        %440 = vmatpush2.msra.mxu0 0.0
        %441 = vmatprep.subr.mxu0 0.0
        %442 = vmatpush2.msra.mxu0 0.0
        %443 = vmatprep.subr.mxu0 0.0
        %444 = vmatpush2.msra.mxu0 0.0
        %445 = vmatprep.subr.mxu0 0.0
        %446 = vmatpush2.msra.mxu0 0.0
        %447 = vmatprep.subr.mxu0 0.0
        %448 = vmatpush2.msra.mxu0 0.0
        %449 = vmatprep.subr.mxu0 0.0
        %450 = vmatpush2.msra.mxu0 0.0
        %451 = vmatprep.subr.mxu0 0.0
        %452 = vmatpush2.msra.mxu0 0.0
        %453 = vmatprep.subr.mxu0 0.0
        %454 = vmatpush2.msra.mxu0 0.0
        %455 = vmatprep.subr.mxu0 0.0
        %456 = vmatpush2.msra.mxu0 0.0
        %457 = vmatprep.subr.mxu0 0.0
        %458 = vmatpush2.msra.mxu0 0.0
        %459 = vmatprep.mubr.f32.mxu0 0.0
        %460 = vmatmul.mubr.f32.gmra.mxu0 0.0
        %v461 = vpop.f32.mrf.mxu0
        %v462 = vadd.f32 0.0, %v461
        %v463 = vpop.f32.mrf.mxu0
        %v464 = vadd.f32 0.0, %v463
        %465 = vdwg.mxu0
        %466 = vmatprep.subr.mxu0 %v371
        %467 = vmatpush1.msra.mxu0 %v370
        %468 = vmatprep.subr.mxu0 %v367
        %469 = vmatpush1.msra.mxu0 %v366
        %470 = vmatprep.subr.mxu0 %v363
        %471 = vmatpush1.msra.mxu0 %v362
        %472 = vmatprep.subr.mxu0 %v359
        %473 = vmatpush1.msra.mxu0 %v358
        %474 = vmatprep.subr.mxu0 %v355
        %475 = vmatpush1.msra.mxu0 %v354
        %476 = vmatprep.subr.mxu0 %v351
        %477 = vmatpush1.msra.mxu0 %v350
        %478 = vmatprep.subr.mxu0 %v347
        %479 = vmatpush1.msra.mxu0 %v346
        %480 = vmatprep.subr.mxu0 %v343
        %481 = vmatpush1.msra.mxu0 %v342
        %482 = vmatprep.subr.mxu0 %v339
        %483 = vmatpush1.msra.mxu0 %v338
        %484 = vmatprep.subr.mxu0 %v335
        %485 = vmatpush1.msra.mxu0 %v334
        %486 = vmatprep.subr.mxu0 %v331
        %487 = vmatpush1.msra.mxu0 %v330
        %488 = vmatprep.subr.mxu0 %v327
        %489 = vmatpush1.msra.mxu0 %v326
        %490 = vmatprep.subr.mxu0 %v323
        %491 = vmatpush1.msra.mxu0 %v322
        %492 = vmatprep.subr.mxu0 %v319
        %493 = vmatpush1.msra.mxu0 %v318
        %494 = vmatprep.subr.mxu0 %v315
        %495 = vmatpush1.msra.mxu0 %v314
        %496 = vmatprep.subr.mxu0 %v311
        %497 = vmatpush1.msra.mxu0 %v310
        %498 = vmatprep.subr.mxu0 0.0
        %499 = vmatpush2.msra.mxu0 0.0
        %500 = vmatprep.subr.mxu0 0.0
        %501 = vmatpush2.msra.mxu0 0.0
        %502 = vmatprep.subr.mxu0 0.0
        %503 = vmatpush2.msra.mxu0 0.0
        %504 = vmatprep.subr.mxu0 0.0
        %505 = vmatpush2.msra.mxu0 0.0
        %506 = vmatprep.subr.mxu0 0.0
        %507 = vmatpush2.msra.mxu0 0.0
        %508 = vmatprep.subr.mxu0 0.0
        %509 = vmatpush2.msra.mxu0 0.0
        %510 = vmatprep.subr.mxu0 0.0
        %511 = vmatpush2.msra.mxu0 0.0
        %512 = vmatprep.subr.mxu0 0.0
        %513 = vmatpush2.msra.mxu0 0.0
        %514 = vmatprep.subr.mxu0 0.0
        %515 = vmatpush2.msra.mxu0 0.0
        %516 = vmatprep.subr.mxu0 0.0
        %517 = vmatpush2.msra.mxu0 0.0
        %518 = vmatprep.subr.mxu0 0.0
        %519 = vmatpush2.msra.mxu0 0.0
        %520 = vmatprep.subr.mxu0 0.0
        %521 = vmatpush2.msra.mxu0 0.0
        %522 = vmatprep.subr.mxu0 0.0
        %523 = vmatpush2.msra.mxu0 0.0
        %524 = vmatprep.subr.mxu0 0.0
        %525 = vmatpush2.msra.mxu0 0.0
        %526 = vmatprep.subr.mxu0 0.0
        %527 = vmatpush2.msra.mxu0 0.0
        %528 = vmatprep.subr.mxu0 0.0
        %529 = vmatpush2.msra.mxu0 0.0
        %530 = vmatprep.mubr.f32.mxu0 0.0
        %531 = vmatmul.mubr.f32.gmra.mxu0 0.0
        %v532 = vpop.f32.mrf.mxu0
        %v533 = vadd.f32 0.0, %v532
        %v534 = vpop.f32.mrf.mxu0
        %v535 = vadd.f32 0.0, %v534
        %536 = vdwg.mxu0
        %v541 = vcombine.low %v462, %v464
        %v542 = vcombine.low %v533, %v535
        %v544 = vunpack.c.l.s4 1966171168
        %v545 = vunpack.c.0.s8 %v544
        %v546 = vlaneseq
        %v547 = vshrl.u32 %v546, 7
        %v548 = vsub.s32 %v545, %v547
        %v549 = vrot.slane %v541, %v548
        %v551 = vunpack.c.l.s4 1966171168
        %v552 = vunpack.c.0.s8 %v551
        %v553 = vlaneseq
        %v554 = vshrl.u32 %v553, 7
        %v555 = vsub.s32 %v552, %v554
        %v556 = vrot.slane %v542, %v555
        %v557 = vcombine.low %v549, %v556
        %v559 = vunpack.c.l.s4 1966171168
        %v560 = vunpack.c.0.s8 %v559
        %v561 = vlaneseq
        %v562 = vshrl.u32 %v561, 7
        %v563 = vsub.s32 %v560, %v562
        %v564 = vrot.slane %v557, %v563
        %v566 = vadd.f32 %v394, %v564
        %v567 = vxor.u32 %v566, 2147483648
        %v568 = vmul.f32 %v567, 1.442695
        %v569 = vpow.pop %v568
        %v570 = vadd.f32 %v569, 1.0
        %v571 = vrcp.pop %v570
        %v572 = vmul.f32 1.0, %v571
        %v574 = vrot.slane %v566, 1
        %v576 = vxor.u32 %v574, 2147483648
        %v577 = vmul.f32 %v576, 1.442695
        %v578 = vpow.pop %v577
        %v579 = vadd.f32 %v578, 1.0
        %v580 = vrcp.pop %v579
        %v581 = vmul.f32 1.0, %v580
        %v582 = vrot.slane %v566, 2
        %v584 = vtanh.pop %v582
        %v585 = vrot.slane %v566, 3
        %v587 = vxor.u32 %v585, 2147483648
        %v588 = vmul.f32 %v587, 1.442695
        %v589 = vpow.pop %v588
        %v590 = vadd.f32 %v589, 1.0
        %v591 = vrcp.pop %v590
        %v592 = vmul.f32 1.0, %v591
        %v593 = vmul.f32 %v581, 0.0
        %v594 = vmul.f32 %v572, %v584
        %v595 = vadd.f32 %v593, %v594
        %v596 = vtanh.pop %v595
        %v597 = vmul.f32 %v592, %v596
        %s598 = sadd.s32 %s372, 1
        %s599 = sld [smem:[#allocation3 + %s598]]
        %s600 = sshra.s32 %s599, 3
        %s601 = sand.u32 %s599, 7
        %s602 = sshra.s32 %s599, 3
        %s603 = sand.u32 %s599, 7
        %s604 = smul.u32 %s600, 4
        %s605 = smul.u32 %s604, 8
        %s606 = sadd.s32 %s605, %s603
        %s607 = scalar_lea.vmem [#allocation4], %s606
        %v608 = vld [vmem:[%s607] ss:$8 sm:$0xf]
        %s609 = sadd.s32 %s372, 6
        %s610 = sld [smem:[#allocation3 + %s609]]
        %s611 = sshra.s32 %s610, 3
        %s612 = sand.u32 %s610, 7
        %s613 = sshra.s32 %s610, 3
        %s614 = sand.u32 %s610, 7
        %s615 = smul.u32 %s611, 4
        %s616 = smul.u32 %s615, 8
        %s617 = sadd.s32 %s616, %s614
        %s618 = scalar_lea.vmem [#allocation7], %s617
        %v619 = vld [vmem:[%s618] ss:$8 sm:$0xf]
        %v620 = vadd.f32 %v608, %v619
        %621 = vmatprep.subr.mxu0 %v369
        %622 = vmatpush1.msra.mxu0 %v368
        %623 = vmatprep.subr.mxu0 %v365
        %624 = vmatpush1.msra.mxu0 %v364
        %625 = vmatprep.subr.mxu0 %v361
        %626 = vmatpush1.msra.mxu0 %v360
        %627 = vmatprep.subr.mxu0 %v357
        %628 = vmatpush1.msra.mxu0 %v356
        %629 = vmatprep.subr.mxu0 %v353
        %630 = vmatpush1.msra.mxu0 %v352
        %631 = vmatprep.subr.mxu0 %v349
        %632 = vmatpush1.msra.mxu0 %v348
        %633 = vmatprep.subr.mxu0 %v345
        %634 = vmatpush1.msra.mxu0 %v344
        %635 = vmatprep.subr.mxu0 %v341
        %636 = vmatpush1.msra.mxu0 %v340
        %637 = vmatprep.subr.mxu0 %v337
        %638 = vmatpush1.msra.mxu0 %v336
        %639 = vmatprep.subr.mxu0 %v333
        %640 = vmatpush1.msra.mxu0 %v332
        %641 = vmatprep.subr.mxu0 %v329
        %642 = vmatpush1.msra.mxu0 %v328
        %643 = vmatprep.subr.mxu0 %v325
        %644 = vmatpush1.msra.mxu0 %v324
        %645 = vmatprep.subr.mxu0 %v321
        %646 = vmatpush1.msra.mxu0 %v320
        %647 = vmatprep.subr.mxu0 %v317
        %648 = vmatpush1.msra.mxu0 %v316
        %649 = vmatprep.subr.mxu0 %v313
        %650 = vmatpush1.msra.mxu0 %v312
        %651 = vmatprep.subr.mxu0 %v309
        %652 = vmatpush1.msra.mxu0 %v308
        %653 = vmatprep.subr.mxu0 0.0
        %654 = vmatpush2.msra.mxu0 0.0
        %655 = vmatprep.subr.mxu0 0.0
        %656 = vmatpush2.msra.mxu0 0.0
        %657 = vmatprep.subr.mxu0 0.0
        %658 = vmatpush2.msra.mxu0 0.0
        %659 = vmatprep.subr.mxu0 0.0
        %660 = vmatpush2.msra.mxu0 0.0
        %661 = vmatprep.subr.mxu0 0.0
        %662 = vmatpush2.msra.mxu0 0.0
        %663 = vmatprep.subr.mxu0 0.0
        %664 = vmatpush2.msra.mxu0 0.0
        %665 = vmatprep.subr.mxu0 0.0
        %666 = vmatpush2.msra.mxu0 0.0
        %667 = vmatprep.subr.mxu0 0.0
        %668 = vmatpush2.msra.mxu0 0.0
        %669 = vmatprep.subr.mxu0 0.0
        %670 = vmatpush2.msra.mxu0 0.0
        %671 = vmatprep.subr.mxu0 0.0
        %672 = vmatpush2.msra.mxu0 0.0
        %673 = vmatprep.subr.mxu0 0.0
        %674 = vmatpush2.msra.mxu0 0.0
        %675 = vmatprep.subr.mxu0 0.0
        %676 = vmatpush2.msra.mxu0 0.0
        %677 = vmatprep.subr.mxu0 0.0
        %678 = vmatpush2.msra.mxu0 0.0
        %679 = vmatprep.subr.mxu0 0.0
        %680 = vmatpush2.msra.mxu0 0.0
        %681 = vmatprep.subr.mxu0 0.0
        %682 = vmatpush2.msra.mxu0 0.0
        %683 = vmatprep.subr.mxu0 0.0
        %684 = vmatpush2.msra.mxu0 0.0
        %685 = vmatprep.mubr.f32.mxu0 0.0
        %686 = vmatmul.mubr.f32.gmra.mxu0 %v597
        %v687 = vpop.f32.mrf.mxu0
        %v688 = vadd.f32 0.0, %v687
        %v689 = vpop.f32.mrf.mxu0
        %v690 = vadd.f32 0.0, %v689
        %691 = vdwg.mxu0
        %692 = vmatprep.subr.mxu0 %v371
        %693 = vmatpush1.msra.mxu0 %v370
        %694 = vmatprep.subr.mxu0 %v367
        %695 = vmatpush1.msra.mxu0 %v366
        %696 = vmatprep.subr.mxu0 %v363
        %697 = vmatpush1.msra.mxu0 %v362
        %698 = vmatprep.subr.mxu0 %v359
        %699 = vmatpush1.msra.mxu0 %v358
        %700 = vmatprep.subr.mxu0 %v355
        %701 = vmatpush1.msra.mxu0 %v354
        %702 = vmatprep.subr.mxu0 %v351
        %703 = vmatpush1.msra.mxu0 %v350
        %704 = vmatprep.subr.mxu0 %v347
        %705 = vmatpush1.msra.mxu0 %v346
        %706 = vmatprep.subr.mxu0 %v343
        %707 = vmatpush1.msra.mxu0 %v342
        %708 = vmatprep.subr.mxu0 %v339
        %709 = vmatpush1.msra.mxu0 %v338
        %710 = vmatprep.subr.mxu0 %v335
        %711 = vmatpush1.msra.mxu0 %v334
        %712 = vmatprep.subr.mxu0 %v331
        %713 = vmatpush1.msra.mxu0 %v330
        %714 = vmatprep.subr.mxu0 %v327
        %715 = vmatpush1.msra.mxu0 %v326
        %716 = vmatprep.subr.mxu0 %v323
        %717 = vmatpush1.msra.mxu0 %v322
        %718 = vmatprep.subr.mxu0 %v319
        %719 = vmatpush1.msra.mxu0 %v318
        %720 = vmatprep.subr.mxu0 %v315
        %721 = vmatpush1.msra.mxu0 %v314
        %722 = vmatprep.subr.mxu0 %v311
        %723 = vmatpush1.msra.mxu0 %v310
        %724 = vmatprep.subr.mxu0 0.0
        %725 = vmatpush2.msra.mxu0 0.0
        %726 = vmatprep.subr.mxu0 0.0
        %727 = vmatpush2.msra.mxu0 0.0
        %728 = vmatprep.subr.mxu0 0.0
        %729 = vmatpush2.msra.mxu0 0.0
        %730 = vmatprep.subr.mxu0 0.0
        %731 = vmatpush2.msra.mxu0 0.0
        %732 = vmatprep.subr.mxu0 0.0
        %733 = vmatpush2.msra.mxu0 0.0
        %734 = vmatprep.subr.mxu0 0.0
        %735 = vmatpush2.msra.mxu0 0.0
        %736 = vmatprep.subr.mxu0 0.0
        %737 = vmatpush2.msra.mxu0 0.0
        %738 = vmatprep.subr.mxu0 0.0
        %739 = vmatpush2.msra.mxu0 0.0
        %740 = vmatprep.subr.mxu0 0.0
        %741 = vmatpush2.msra.mxu0 0.0
        %742 = vmatprep.subr.mxu0 0.0
        %743 = vmatpush2.msra.mxu0 0.0
        %744 = vmatprep.subr.mxu0 0.0
        %745 = vmatpush2.msra.mxu0 0.0
        %746 = vmatprep.subr.mxu0 0.0
        %747 = vmatpush2.msra.mxu0 0.0
        %748 = vmatprep.subr.mxu0 0.0
        %749 = vmatpush2.msra.mxu0 0.0
        %750 = vmatprep.subr.mxu0 0.0
        %751 = vmatpush2.msra.mxu0 0.0
        %752 = vmatprep.subr.mxu0 0.0
        %753 = vmatpush2.msra.mxu0 0.0
        %754 = vmatprep.subr.mxu0 0.0
        %755 = vmatpush2.msra.mxu0 0.0
        %756 = vmatprep.mubr.f32.mxu0 0.0
        %757 = vmatmul.mubr.f32.gmra.mxu0 %v597
        %v758 = vpop.f32.mrf.mxu0
        %v759 = vadd.f32 0.0, %v758
        %v760 = vpop.f32.mrf.mxu0
        %v761 = vadd.f32 0.0, %v760
        %762 = vdwg.mxu0
        %v767 = vcombine.low %v688, %v690
        %v768 = vcombine.low %v759, %v761
        %v770 = vunpack.c.l.s4 1966171168
        %v771 = vunpack.c.0.s8 %v770
        %v772 = vlaneseq
        %v773 = vshrl.u32 %v772, 7
        %v774 = vsub.s32 %v771, %v773
        %v775 = vrot.slane %v767, %v774
        %v777 = vunpack.c.l.s4 1966171168
        %v778 = vunpack.c.0.s8 %v777
        %v779 = vlaneseq
        %v780 = vshrl.u32 %v779, 7
        %v781 = vsub.s32 %v778, %v780
        %v782 = vrot.slane %v768, %v781
        %v783 = vcombine.low %v775, %v782
        %v785 = vunpack.c.l.s4 1966171168
        %v786 = vunpack.c.0.s8 %v785
        %v787 = vlaneseq
        %v788 = vshrl.u32 %v787, 7
        %v789 = vsub.s32 %v786, %v788
        %v790 = vrot.slane %v783, %v789
        %v792 = vadd.f32 %v620, %v790
        %v793 = vxor.u32 %v792, 2147483648
        %v794 = vmul.f32 %v793, 1.442695
        %v795 = vpow.pop %v794
        %v796 = vadd.f32 %v795, 1.0
        %v797 = vrcp.pop %v796
        %v798 = vmul.f32 1.0, %v797
        %v800 = vrot.slane %v792, 1
        %v802 = vxor.u32 %v800, 2147483648
        %v803 = vmul.f32 %v802, 1.442695
        %v804 = vpow.pop %v803
        %v805 = vadd.f32 %v804, 1.0
        %v806 = vrcp.pop %v805
        %v807 = vmul.f32 1.0, %v806
        %v808 = vrot.slane %v792, 2
        %v810 = vtanh.pop %v808
        %v811 = vrot.slane %v792, 3
        %v813 = vxor.u32 %v811, 2147483648
        %v814 = vmul.f32 %v813, 1.442695
        %v815 = vpow.pop %v814
        %v816 = vadd.f32 %v815, 1.0
        %v817 = vrcp.pop %v816
        %v818 = vmul.f32 1.0, %v817
        %v819 = vmul.f32 %v807, %v595
        %v820 = vmul.f32 %v798, %v810
        %v821 = vadd.f32 %v819, %v820
        %v822 = vtanh.pop %v821
        %v823 = vmul.f32 %v818, %v822
        %s824 = sadd.s32 %s372, 2
        %s825 = sld [smem:[#allocation3 + %s824]]
        %s826 = sshra.s32 %s825, 3
        %s827 = sand.u32 %s825, 7
        %s828 = sshra.s32 %s825, 3
        %s829 = sand.u32 %s825, 7
        %s830 = smul.u32 %s826, 4
        %s831 = smul.u32 %s830, 8
        %s832 = sadd.s32 %s831, %s829
        %s833 = scalar_lea.vmem [#allocation4], %s832
        %v834 = vld [vmem:[%s833] ss:$8 sm:$0xf]
        %s835 = sadd.s32 %s372, 5
        %s836 = sld [smem:[#allocation3 + %s835]]
        %s837 = sshra.s32 %s836, 3
        %s838 = sand.u32 %s836, 7
        %s839 = sshra.s32 %s836, 3
        %s840 = sand.u32 %s836, 7
        %s841 = smul.u32 %s837, 4
        %s842 = smul.u32 %s841, 8
        %s843 = sadd.s32 %s842, %s840
        %s844 = scalar_lea.vmem [#allocation7], %s843
        %v845 = vld [vmem:[%s844] ss:$8 sm:$0xf]
        %v846 = vadd.f32 %v834, %v845
        %847 = vmatprep.subr.mxu0 %v369
        %848 = vmatpush1.msra.mxu0 %v368
        %849 = vmatprep.subr.mxu0 %v365
        %850 = vmatpush1.msra.mxu0 %v364
        %851 = vmatprep.subr.mxu0 %v361
        %852 = vmatpush1.msra.mxu0 %v360
        %853 = vmatprep.subr.mxu0 %v357
        %854 = vmatpush1.msra.mxu0 %v356
        %855 = vmatprep.subr.mxu0 %v353
        %856 = vmatpush1.msra.mxu0 %v352
        %857 = vmatprep.subr.mxu0 %v349
        %858 = vmatpush1.msra.mxu0 %v348
        %859 = vmatprep.subr.mxu0 %v345
        %860 = vmatpush1.msra.mxu0 %v344
        %861 = vmatprep.subr.mxu0 %v341
        %862 = vmatpush1.msra.mxu0 %v340
        %863 = vmatprep.subr.mxu0 %v337
        %864 = vmatpush1.msra.mxu0 %v336
        %865 = vmatprep.subr.mxu0 %v333
        %866 = vmatpush1.msra.mxu0 %v332
        %867 = vmatprep.subr.mxu0 %v329
        %868 = vmatpush1.msra.mxu0 %v328
        %869 = vmatprep.subr.mxu0 %v325
        %870 = vmatpush1.msra.mxu0 %v324
        %871 = vmatprep.subr.mxu0 %v321
        %872 = vmatpush1.msra.mxu0 %v320
        %873 = vmatprep.subr.mxu0 %v317
        %874 = vmatpush1.msra.mxu0 %v316
        %875 = vmatprep.subr.mxu0 %v313
        %876 = vmatpush1.msra.mxu0 %v312
        %877 = vmatprep.subr.mxu0 %v309
        %878 = vmatpush1.msra.mxu0 %v308
        %879 = vmatprep.subr.mxu0 0.0
        %880 = vmatpush2.msra.mxu0 0.0
        %881 = vmatprep.subr.mxu0 0.0
        %882 = vmatpush2.msra.mxu0 0.0
        %883 = vmatprep.subr.mxu0 0.0
        %884 = vmatpush2.msra.mxu0 0.0
        %885 = vmatprep.subr.mxu0 0.0
        %886 = vmatpush2.msra.mxu0 0.0
        %887 = vmatprep.subr.mxu0 0.0
        %888 = vmatpush2.msra.mxu0 0.0
        %889 = vmatprep.subr.mxu0 0.0
        %890 = vmatpush2.msra.mxu0 0.0
        %891 = vmatprep.subr.mxu0 0.0
        %892 = vmatpush2.msra.mxu0 0.0
        %893 = vmatprep.subr.mxu0 0.0
        %894 = vmatpush2.msra.mxu0 0.0
        %895 = vmatprep.subr.mxu0 0.0
        %896 = vmatpush2.msra.mxu0 0.0
        %897 = vmatprep.subr.mxu0 0.0
        %898 = vmatpush2.msra.mxu0 0.0
        %899 = vmatprep.subr.mxu0 0.0
        %900 = vmatpush2.msra.mxu0 0.0
        %901 = vmatprep.subr.mxu0 0.0
        %902 = vmatpush2.msra.mxu0 0.0
        %903 = vmatprep.subr.mxu0 0.0
        %904 = vmatpush2.msra.mxu0 0.0
        %905 = vmatprep.subr.mxu0 0.0
        %906 = vmatpush2.msra.mxu0 0.0
        %907 = vmatprep.subr.mxu0 0.0
        %908 = vmatpush2.msra.mxu0 0.0
        %909 = vmatprep.subr.mxu0 0.0
        %910 = vmatpush2.msra.mxu0 0.0
        %911 = vmatprep.mubr.f32.mxu0 0.0
        %912 = vmatmul.mubr.f32.gmra.mxu0 %v823
        %v913 = vpop.f32.mrf.mxu0
        %v914 = vadd.f32 0.0, %v913
        %v915 = vpop.f32.mrf.mxu0
        %v916 = vadd.f32 0.0, %v915
        %917 = vdwg.mxu0
        %918 = vmatprep.subr.mxu0 %v371
        %919 = vmatpush1.msra.mxu0 %v370
        %920 = vmatprep.subr.mxu0 %v367
        %921 = vmatpush1.msra.mxu0 %v366
        %922 = vmatprep.subr.mxu0 %v363
        %923 = vmatpush1.msra.mxu0 %v362
        %924 = vmatprep.subr.mxu0 %v359
        %925 = vmatpush1.msra.mxu0 %v358
        %926 = vmatprep.subr.mxu0 %v355
        %927 = vmatpush1.msra.mxu0 %v354
        %928 = vmatprep.subr.mxu0 %v351
        %929 = vmatpush1.msra.mxu0 %v350
        %930 = vmatprep.subr.mxu0 %v347
        %931 = vmatpush1.msra.mxu0 %v346
        %932 = vmatprep.subr.mxu0 %v343
        %933 = vmatpush1.msra.mxu0 %v342
        %934 = vmatprep.subr.mxu0 %v339
        %935 = vmatpush1.msra.mxu0 %v338
        %936 = vmatprep.subr.mxu0 %v335
        %937 = vmatpush1.msra.mxu0 %v334
        %938 = vmatprep.subr.mxu0 %v331
        %939 = vmatpush1.msra.mxu0 %v330
        %940 = vmatprep.subr.mxu0 %v327
        %941 = vmatpush1.msra.mxu0 %v326
        %942 = vmatprep.subr.mxu0 %v323
        %943 = vmatpush1.msra.mxu0 %v322
        %944 = vmatprep.subr.mxu0 %v319
        %945 = vmatpush1.msra.mxu0 %v318
        %946 = vmatprep.subr.mxu0 %v315
        %947 = vmatpush1.msra.mxu0 %v314
        %948 = vmatprep.subr.mxu0 %v311
        %949 = vmatpush1.msra.mxu0 %v310
        %950 = vmatprep.subr.mxu0 0.0
        %951 = vmatpush2.msra.mxu0 0.0
        %952 = vmatprep.subr.mxu0 0.0
        %953 = vmatpush2.msra.mxu0 0.0
        %954 = vmatprep.subr.mxu0 0.0
        %955 = vmatpush2.msra.mxu0 0.0
        %956 = vmatprep.subr.mxu0 0.0
        %957 = vmatpush2.msra.mxu0 0.0
        %958 = vmatprep.subr.mxu0 0.0
        %959 = vmatpush2.msra.mxu0 0.0
        %960 = vmatprep.subr.mxu0 0.0
        %961 = vmatpush2.msra.mxu0 0.0
        %962 = vmatprep.subr.mxu0 0.0
        %963 = vmatpush2.msra.mxu0 0.0
        %964 = vmatprep.subr.mxu0 0.0
        %965 = vmatpush2.msra.mxu0 0.0
        %966 = vmatprep.subr.mxu0 0.0
        %967 = vmatpush2.msra.mxu0 0.0
        %968 = vmatprep.subr.mxu0 0.0
        %969 = vmatpush2.msra.mxu0 0.0
        %970 = vmatprep.subr.mxu0 0.0
        %971 = vmatpush2.msra.mxu0 0.0
        %972 = vmatprep.subr.mxu0 0.0
        %973 = vmatpush2.msra.mxu0 0.0
        %974 = vmatprep.subr.mxu0 0.0
        %975 = vmatpush2.msra.mxu0 0.0
        %976 = vmatprep.subr.mxu0 0.0
        %977 = vmatpush2.msra.mxu0 0.0
        %978 = vmatprep.subr.mxu0 0.0
        %979 = vmatpush2.msra.mxu0 0.0
        %980 = vmatprep.subr.mxu0 0.0
        %981 = vmatpush2.msra.mxu0 0.0
        %982 = vmatprep.mubr.f32.mxu0 0.0
        %983 = vmatmul.mubr.f32.gmra.mxu0 %v823
        %v984 = vpop.f32.mrf.mxu0
        %v985 = vadd.f32 0.0, %v984
        %v986 = vpop.f32.mrf.mxu0
        %v987 = vadd.f32 0.0, %v986
        %988 = vdwg.mxu0
        %v993 = vcombine.low %v914, %v916
        %v994 = vcombine.low %v985, %v987
        %v996 = vunpack.c.l.s4 1966171168
        %v997 = vunpack.c.0.s8 %v996
        %v998 = vlaneseq
        %v999 = vshrl.u32 %v998, 7
        %v1000 = vsub.s32 %v997, %v999
        %v1001 = vrot.slane %v993, %v1000
        %v1003 = vunpack.c.l.s4 1966171168
        %v1004 = vunpack.c.0.s8 %v1003
        %v1005 = vlaneseq
        %v1006 = vshrl.u32 %v1005, 7
        %v1007 = vsub.s32 %v1004, %v1006
        %v1008 = vrot.slane %v994, %v1007
        %v1009 = vcombine.low %v1001, %v1008
        %v1011 = vunpack.c.l.s4 1966171168
        %v1012 = vunpack.c.0.s8 %v1011
        %v1013 = vlaneseq
        %v1014 = vshrl.u32 %v1013, 7
        %v1015 = vsub.s32 %v1012, %v1014
        %v1016 = vrot.slane %v1009, %v1015
        %v1018 = vadd.f32 %v846, %v1016
        %v1019 = vxor.u32 %v1018, 2147483648
        %v1020 = vmul.f32 %v1019, 1.442695
        %v1021 = vpow.pop %v1020
        %v1022 = vadd.f32 %v1021, 1.0
        %v1023 = vrcp.pop %v1022
        %v1024 = vmul.f32 1.0, %v1023
        %v1026 = vrot.slane %v1018, 1
        %v1028 = vxor.u32 %v1026, 2147483648
        %v1029 = vmul.f32 %v1028, 1.442695
        %v1030 = vpow.pop %v1029
        %v1031 = vadd.f32 %v1030, 1.0
        %v1032 = vrcp.pop %v1031
        %v1033 = vmul.f32 1.0, %v1032
        %v1034 = vrot.slane %v1018, 2
        %v1036 = vtanh.pop %v1034
        %v1037 = vrot.slane %v1018, 3
        %v1039 = vxor.u32 %v1037, 2147483648
        %v1040 = vmul.f32 %v1039, 1.442695
        %v1041 = vpow.pop %v1040
        %v1042 = vadd.f32 %v1041, 1.0
        %v1043 = vrcp.pop %v1042
        %v1044 = vmul.f32 1.0, %v1043
        %v1045 = vmul.f32 %v1033, %v821
        %v1046 = vmul.f32 %v1024, %v1036
        %v1047 = vadd.f32 %v1045, %v1046
        %v1048 = vtanh.pop %v1047
        %v1049 = vmul.f32 %v1044, %v1048
        %s1050 = sadd.s32 %s372, 3
        %s1051 = sld [smem:[#allocation3 + %s1050]]
        %s1052 = sshra.s32 %s1051, 3
        %s1053 = sand.u32 %s1051, 7
        %s1054 = sshra.s32 %s1051, 3
        %s1055 = sand.u32 %s1051, 7
        %s1056 = smul.u32 %s1052, 4
        %s1057 = smul.u32 %s1056, 8
        %s1058 = sadd.s32 %s1057, %s1055
        %s1059 = scalar_lea.vmem [#allocation4], %s1058
        %v1060 = vld [vmem:[%s1059] ss:$8 sm:$0xf]
        %s1061 = sadd.s32 %s372, 4
        %s1062 = sld [smem:[#allocation3 + %s1061]]
        %s1063 = sshra.s32 %s1062, 3
        %s1064 = sand.u32 %s1062, 7
        %s1065 = sshra.s32 %s1062, 3
        %s1066 = sand.u32 %s1062, 7
        %s1067 = smul.u32 %s1063, 4
        %s1068 = smul.u32 %s1067, 8
        %s1069 = sadd.s32 %s1068, %s1066
        %s1070 = scalar_lea.vmem [#allocation7], %s1069
        %v1071 = vld [vmem:[%s1070] ss:$8 sm:$0xf]
        %v1072 = vadd.f32 %v1060, %v1071
        %1073 = vmatprep.subr.mxu0 %v369
        %1074 = vmatpush1.msra.mxu0 %v368
        %1075 = vmatprep.subr.mxu0 %v365
        %1076 = vmatpush1.msra.mxu0 %v364
        %1077 = vmatprep.subr.mxu0 %v361
        %1078 = vmatpush1.msra.mxu0 %v360
        %1079 = vmatprep.subr.mxu0 %v357
        %1080 = vmatpush1.msra.mxu0 %v356
        %1081 = vmatprep.subr.mxu0 %v353
        %1082 = vmatpush1.msra.mxu0 %v352
        %1083 = vmatprep.subr.mxu0 %v349
        %1084 = vmatpush1.msra.mxu0 %v348
        %1085 = vmatprep.subr.mxu0 %v345
        %1086 = vmatpush1.msra.mxu0 %v344
        %1087 = vmatprep.subr.mxu0 %v341
        %1088 = vmatpush1.msra.mxu0 %v340
        %1089 = vmatprep.subr.mxu0 %v337
        %1090 = vmatpush1.msra.mxu0 %v336
        %1091 = vmatprep.subr.mxu0 %v333
        %1092 = vmatpush1.msra.mxu0 %v332
        %1093 = vmatprep.subr.mxu0 %v329
        %1094 = vmatpush1.msra.mxu0 %v328
        %1095 = vmatprep.subr.mxu0 %v325
        %1096 = vmatpush1.msra.mxu0 %v324
        %1097 = vmatprep.subr.mxu0 %v321
        %1098 = vmatpush1.msra.mxu0 %v320
        %1099 = vmatprep.subr.mxu0 %v317
        %1100 = vmatpush1.msra.mxu0 %v316
        %1101 = vmatprep.subr.mxu0 %v313
        %1102 = vmatpush1.msra.mxu0 %v312
        %1103 = vmatprep.subr.mxu0 %v309
        %1104 = vmatpush1.msra.mxu0 %v308
        %1105 = vmatprep.subr.mxu0 0.0
        %1106 = vmatpush2.msra.mxu0 0.0
        %1107 = vmatprep.subr.mxu0 0.0
        %1108 = vmatpush2.msra.mxu0 0.0
        %1109 = vmatprep.subr.mxu0 0.0
        %1110 = vmatpush2.msra.mxu0 0.0
        %1111 = vmatprep.subr.mxu0 0.0
        %1112 = vmatpush2.msra.mxu0 0.0
        %1113 = vmatprep.subr.mxu0 0.0
        %1114 = vmatpush2.msra.mxu0 0.0
        %1115 = vmatprep.subr.mxu0 0.0
        %1116 = vmatpush2.msra.mxu0 0.0
        %1117 = vmatprep.subr.mxu0 0.0
        %1118 = vmatpush2.msra.mxu0 0.0
        %1119 = vmatprep.subr.mxu0 0.0
        %1120 = vmatpush2.msra.mxu0 0.0
        %1121 = vmatprep.subr.mxu0 0.0
        %1122 = vmatpush2.msra.mxu0 0.0
        %1123 = vmatprep.subr.mxu0 0.0
        %1124 = vmatpush2.msra.mxu0 0.0
        %1125 = vmatprep.subr.mxu0 0.0
        %1126 = vmatpush2.msra.mxu0 0.0
        %1127 = vmatprep.subr.mxu0 0.0
        %1128 = vmatpush2.msra.mxu0 0.0
        %1129 = vmatprep.subr.mxu0 0.0
        %1130 = vmatpush2.msra.mxu0 0.0
        %1131 = vmatprep.subr.mxu0 0.0
        %1132 = vmatpush2.msra.mxu0 0.0
        %1133 = vmatprep.subr.mxu0 0.0
        %1134 = vmatpush2.msra.mxu0 0.0
        %1135 = vmatprep.subr.mxu0 0.0
        %1136 = vmatpush2.msra.mxu0 0.0
        %1137 = vmatprep.mubr.f32.mxu0 0.0
        %1138 = vmatmul.mubr.f32.gmra.mxu0 %v1049
        %v1139 = vpop.f32.mrf.mxu0
        %v1140 = vadd.f32 0.0, %v1139
        %v1141 = vpop.f32.mrf.mxu0
        %v1142 = vadd.f32 0.0, %v1141
        %1143 = vdwg.mxu0
        %1144 = vmatprep.subr.mxu0 %v371
        %1145 = vmatpush1.msra.mxu0 %v370
        %1146 = vmatprep.subr.mxu0 %v367
        %1147 = vmatpush1.msra.mxu0 %v366
        %1148 = vmatprep.subr.mxu0 %v363
        %1149 = vmatpush1.msra.mxu0 %v362
        %1150 = vmatprep.subr.mxu0 %v359
        %1151 = vmatpush1.msra.mxu0 %v358
        %1152 = vmatprep.subr.mxu0 %v355
        %1153 = vmatpush1.msra.mxu0 %v354
        %1154 = vmatprep.subr.mxu0 %v351
        %1155 = vmatpush1.msra.mxu0 %v350
        %1156 = vmatprep.subr.mxu0 %v347
        %1157 = vmatpush1.msra.mxu0 %v346
        %1158 = vmatprep.subr.mxu0 %v343
        %1159 = vmatpush1.msra.mxu0 %v342
        %1160 = vmatprep.subr.mxu0 %v339
        %1161 = vmatpush1.msra.mxu0 %v338
        %1162 = vmatprep.subr.mxu0 %v335
        %1163 = vmatpush1.msra.mxu0 %v334
        %1164 = vmatprep.subr.mxu0 %v331
        %1165 = vmatpush1.msra.mxu0 %v330
        %1166 = vmatprep.subr.mxu0 %v327
        %1167 = vmatpush1.msra.mxu0 %v326
        %1168 = vmatprep.subr.mxu0 %v323
        %1169 = vmatpush1.msra.mxu0 %v322
        %1170 = vmatprep.subr.mxu0 %v319
        %1171 = vmatpush1.msra.mxu0 %v318
        %1172 = vmatprep.subr.mxu0 %v315
        %1173 = vmatpush1.msra.mxu0 %v314
        %1174 = vmatprep.subr.mxu0 %v311
        %1175 = vmatpush1.msra.mxu0 %v310
        %1176 = vmatprep.subr.mxu0 0.0
        %1177 = vmatpush2.msra.mxu0 0.0
        %1178 = vmatprep.subr.mxu0 0.0
        %1179 = vmatpush2.msra.mxu0 0.0
        %1180 = vmatprep.subr.mxu0 0.0
        %1181 = vmatpush2.msra.mxu0 0.0
        %1182 = vmatprep.subr.mxu0 0.0
        %1183 = vmatpush2.msra.mxu0 0.0
        %1184 = vmatprep.subr.mxu0 0.0
        %1185 = vmatpush2.msra.mxu0 0.0
        %1186 = vmatprep.subr.mxu0 0.0
        %1187 = vmatpush2.msra.mxu0 0.0
        %1188 = vmatprep.subr.mxu0 0.0
        %1189 = vmatpush2.msra.mxu0 0.0
        %1190 = vmatprep.subr.mxu0 0.0
        %1191 = vmatpush2.msra.mxu0 0.0
        %1192 = vmatprep.subr.mxu0 0.0
        %1193 = vmatpush2.msra.mxu0 0.0
        %1194 = vmatprep.subr.mxu0 0.0
        %1195 = vmatpush2.msra.mxu0 0.0
        %1196 = vmatprep.subr.mxu0 0.0
        %1197 = vmatpush2.msra.mxu0 0.0
        %1198 = vmatprep.subr.mxu0 0.0
        %1199 = vmatpush2.msra.mxu0 0.0
        %1200 = vmatprep.subr.mxu0 0.0
        %1201 = vmatpush2.msra.mxu0 0.0
        %1202 = vmatprep.subr.mxu0 0.0
        %1203 = vmatpush2.msra.mxu0 0.0
        %1204 = vmatprep.subr.mxu0 0.0
        %1205 = vmatpush2.msra.mxu0 0.0
        %1206 = vmatprep.subr.mxu0 0.0
        %1207 = vmatpush2.msra.mxu0 0.0
        %1208 = vmatprep.mubr.f32.mxu0 0.0
        %1209 = vmatmul.mubr.f32.gmra.mxu0 %v1049
        %v1210 = vpop.f32.mrf.mxu0
        %v1211 = vadd.f32 0.0, %v1210
        %v1212 = vpop.f32.mrf.mxu0
        %v1213 = vadd.f32 0.0, %v1212
        %1214 = vdwg.mxu0
        %v1219 = vcombine.low %v1140, %v1142
        %v1220 = vcombine.low %v1211, %v1213
        %v1222 = vunpack.c.l.s4 1966171168
        %v1223 = vunpack.c.0.s8 %v1222
        %v1224 = vlaneseq
        %v1225 = vshrl.u32 %v1224, 7
        %v1226 = vsub.s32 %v1223, %v1225
        %v1227 = vrot.slane %v1219, %v1226
        %v1229 = vunpack.c.l.s4 1966171168
        %v1230 = vunpack.c.0.s8 %v1229
        %v1231 = vlaneseq
        %v1232 = vshrl.u32 %v1231, 7
        %v1233 = vsub.s32 %v1230, %v1232
        %v1234 = vrot.slane %v1220, %v1233
        %v1235 = vcombine.low %v1227, %v1234
        %v1237 = vunpack.c.l.s4 1966171168
        %v1238 = vunpack.c.0.s8 %v1237
        %v1239 = vlaneseq
        %v1240 = vshrl.u32 %v1239, 7
        %v1241 = vsub.s32 %v1238, %v1240
        %v1242 = vrot.slane %v1235, %v1241
        %v1244 = vadd.f32 %v1072, %v1242
        %v1245 = vxor.u32 %v1244, 2147483648
        %v1246 = vmul.f32 %v1245, 1.442695
        %v1247 = vpow.pop %v1246
        %v1248 = vadd.f32 %v1247, 1.0
        %v1249 = vrcp.pop %v1248
        %v1250 = vmul.f32 1.0, %v1249
        %v1252 = vrot.slane %v1244, 1
        %v1254 = vxor.u32 %v1252, 2147483648
        %v1255 = vmul.f32 %v1254, 1.442695
        %v1256 = vpow.pop %v1255
        %v1257 = vadd.f32 %v1256, 1.0
        %v1258 = vrcp.pop %v1257
        %v1259 = vmul.f32 1.0, %v1258
        %v1260 = vrot.slane %v1244, 2
        %v1262 = vtanh.pop %v1260
        %v1263 = vrot.slane %v1244, 3
        %v1265 = vxor.u32 %v1263, 2147483648
        %v1266 = vmul.f32 %v1265, 1.442695
        %v1267 = vpow.pop %v1266
        %v1268 = vadd.f32 %v1267, 1.0
        %v1269 = vrcp.pop %v1268
        %v1270 = vmul.f32 1.0, %v1269
        %v1271 = vmul.f32 %v1259, %v1047
        %v1272 = vmul.f32 %v1250, %v1262
        %v1273 = vadd.f32 %v1271, %v1272
        %v1274 = vtanh.pop %v1273
        %v1275 = vmul.f32 %v1270, %v1274
        %s1276 = scalar_lea.vmem [#allocation4], %s1069
        %v1277 = vld [vmem:[%s1276] ss:$8 sm:$0xf]
        %s1278 = scalar_lea.vmem [#allocation7], %s1058
        %v1279 = vld [vmem:[%s1278] ss:$8 sm:$0xf]
        %v1280 = vadd.f32 %v1277, %v1279
        %1281 = vmatprep.subr.mxu0 %v369
        %1282 = vmatpush1.msra.mxu0 %v368
        %1283 = vmatprep.subr.mxu0 %v365
        %1284 = vmatpush1.msra.mxu0 %v364
        %1285 = vmatprep.subr.mxu0 %v361
        %1286 = vmatpush1.msra.mxu0 %v360
        %1287 = vmatprep.subr.mxu0 %v357
        %1288 = vmatpush1.msra.mxu0 %v356
        %1289 = vmatprep.subr.mxu0 %v353
        %1290 = vmatpush1.msra.mxu0 %v352
        %1291 = vmatprep.subr.mxu0 %v349
        %1292 = vmatpush1.msra.mxu0 %v348
        %1293 = vmatprep.subr.mxu0 %v345
        %1294 = vmatpush1.msra.mxu0 %v344
        %1295 = vmatprep.subr.mxu0 %v341
        %1296 = vmatpush1.msra.mxu0 %v340
        %1297 = vmatprep.subr.mxu0 %v337
        %1298 = vmatpush1.msra.mxu0 %v336
        %1299 = vmatprep.subr.mxu0 %v333
        %1300 = vmatpush1.msra.mxu0 %v332
        %1301 = vmatprep.subr.mxu0 %v329
        %1302 = vmatpush1.msra.mxu0 %v328
        %1303 = vmatprep.subr.mxu0 %v325
        %1304 = vmatpush1.msra.mxu0 %v324
        %1305 = vmatprep.subr.mxu0 %v321
        %1306 = vmatpush1.msra.mxu0 %v320
        %1307 = vmatprep.subr.mxu0 %v317
        %1308 = vmatpush1.msra.mxu0 %v316
        %1309 = vmatprep.subr.mxu0 %v313
        %1310 = vmatpush1.msra.mxu0 %v312
        %1311 = vmatprep.subr.mxu0 %v309
        %1312 = vmatpush1.msra.mxu0 %v308
        %1313 = vmatprep.subr.mxu0 0.0
        %1314 = vmatpush2.msra.mxu0 0.0
        %1315 = vmatprep.subr.mxu0 0.0
        %1316 = vmatpush2.msra.mxu0 0.0
        %1317 = vmatprep.subr.mxu0 0.0
        %1318 = vmatpush2.msra.mxu0 0.0
        %1319 = vmatprep.subr.mxu0 0.0
        %1320 = vmatpush2.msra.mxu0 0.0
        %1321 = vmatprep.subr.mxu0 0.0
        %1322 = vmatpush2.msra.mxu0 0.0
        %1323 = vmatprep.subr.mxu0 0.0
        %1324 = vmatpush2.msra.mxu0 0.0
        %1325 = vmatprep.subr.mxu0 0.0
        %1326 = vmatpush2.msra.mxu0 0.0
        %1327 = vmatprep.subr.mxu0 0.0
        %1328 = vmatpush2.msra.mxu0 0.0
        %1329 = vmatprep.subr.mxu0 0.0
        %1330 = vmatpush2.msra.mxu0 0.0
        %1331 = vmatprep.subr.mxu0 0.0
        %1332 = vmatpush2.msra.mxu0 0.0
        %1333 = vmatprep.subr.mxu0 0.0
        %1334 = vmatpush2.msra.mxu0 0.0
        %1335 = vmatprep.subr.mxu0 0.0
        %1336 = vmatpush2.msra.mxu0 0.0
        %1337 = vmatprep.subr.mxu0 0.0
        %1338 = vmatpush2.msra.mxu0 0.0
        %1339 = vmatprep.subr.mxu0 0.0
        %1340 = vmatpush2.msra.mxu0 0.0
        %1341 = vmatprep.subr.mxu0 0.0
        %1342 = vmatpush2.msra.mxu0 0.0
        %1343 = vmatprep.subr.mxu0 0.0
        %1344 = vmatpush2.msra.mxu0 0.0
        %1345 = vmatprep.mubr.f32.mxu0 0.0
        %1346 = vmatmul.mubr.f32.gmra.mxu0 %v1275
        %v1347 = vpop.f32.mrf.mxu0
        %v1348 = vadd.f32 0.0, %v1347
        %v1349 = vpop.f32.mrf.mxu0
        %v1350 = vadd.f32 0.0, %v1349
        %1351 = vdwg.mxu0
        %1352 = vmatprep.subr.mxu0 %v371
        %1353 = vmatpush1.msra.mxu0 %v370
        %1354 = vmatprep.subr.mxu0 %v367
        %1355 = vmatpush1.msra.mxu0 %v366
        %1356 = vmatprep.subr.mxu0 %v363
        %1357 = vmatpush1.msra.mxu0 %v362
        %1358 = vmatprep.subr.mxu0 %v359
        %1359 = vmatpush1.msra.mxu0 %v358
        %1360 = vmatprep.subr.mxu0 %v355
        %1361 = vmatpush1.msra.mxu0 %v354
        %1362 = vmatprep.subr.mxu0 %v351
        %1363 = vmatpush1.msra.mxu0 %v350
        %1364 = vmatprep.subr.mxu0 %v347
        %1365 = vmatpush1.msra.mxu0 %v346
        %1366 = vmatprep.subr.mxu0 %v343
        %1367 = vmatpush1.msra.mxu0 %v342
        %1368 = vmatprep.subr.mxu0 %v339
        %1369 = vmatpush1.msra.mxu0 %v338
        %1370 = vmatprep.subr.mxu0 %v335
        %1371 = vmatpush1.msra.mxu0 %v334
        %1372 = vmatprep.subr.mxu0 %v331
        %1373 = vmatpush1.msra.mxu0 %v330
        %1374 = vmatprep.subr.mxu0 %v327
        %1375 = vmatpush1.msra.mxu0 %v326
        %1376 = vmatprep.subr.mxu0 %v323
        %1377 = vmatpush1.msra.mxu0 %v322
        %1378 = vmatprep.subr.mxu0 %v319
        %1379 = vmatpush1.msra.mxu0 %v318
        %1380 = vmatprep.subr.mxu0 %v315
        %1381 = vmatpush1.msra.mxu0 %v314
        %1382 = vmatprep.subr.mxu0 %v311
        %1383 = vmatpush1.msra.mxu0 %v310
        %1384 = vmatprep.subr.mxu0 0.0
        %1385 = vmatpush2.msra.mxu0 0.0
        %1386 = vmatprep.subr.mxu0 0.0
        %1387 = vmatpush2.msra.mxu0 0.0
        %1388 = vmatprep.subr.mxu0 0.0
        %1389 = vmatpush2.msra.mxu0 0.0
        %1390 = vmatprep.subr.mxu0 0.0
        %1391 = vmatpush2.msra.mxu0 0.0
        %1392 = vmatprep.subr.mxu0 0.0
        %1393 = vmatpush2.msra.mxu0 0.0
        %1394 = vmatprep.subr.mxu0 0.0
        %1395 = vmatpush2.msra.mxu0 0.0
        %1396 = vmatprep.subr.mxu0 0.0
        %1397 = vmatpush2.msra.mxu0 0.0
        %1398 = vmatprep.subr.mxu0 0.0
        %1399 = vmatpush2.msra.mxu0 0.0
        %1400 = vmatprep.subr.mxu0 0.0
        %1401 = vmatpush2.msra.mxu0 0.0
        %1402 = vmatprep.subr.mxu0 0.0
        %1403 = vmatpush2.msra.mxu0 0.0
        %1404 = vmatprep.subr.mxu0 0.0
        %1405 = vmatpush2.msra.mxu0 0.0
        %1406 = vmatprep.subr.mxu0 0.0
        %1407 = vmatpush2.msra.mxu0 0.0
        %1408 = vmatprep.subr.mxu0 0.0
        %1409 = vmatpush2.msra.mxu0 0.0
        %1410 = vmatprep.subr.mxu0 0.0
        %1411 = vmatpush2.msra.mxu0 0.0
        %1412 = vmatprep.subr.mxu0 0.0
        %1413 = vmatpush2.msra.mxu0 0.0
        %1414 = vmatprep.subr.mxu0 0.0
        %1415 = vmatpush2.msra.mxu0 0.0
        %1416 = vmatprep.mubr.f32.mxu0 0.0
        %1417 = vmatmul.mubr.f32.gmra.mxu0 %v1275
        %v1418 = vpop.f32.mrf.mxu0
        %v1419 = vadd.f32 0.0, %v1418
        %v1420 = vpop.f32.mrf.mxu0
        %v1421 = vadd.f32 0.0, %v1420
        %1422 = vdwg.mxu0
        %v1427 = vcombine.low %v1348, %v1350
        %v1428 = vcombine.low %v1419, %v1421
        %v1430 = vunpack.c.l.s4 1966171168
        %v1431 = vunpack.c.0.s8 %v1430
        %v1432 = vlaneseq
        %v1433 = vshrl.u32 %v1432, 7
        %v1434 = vsub.s32 %v1431, %v1433
        %v1435 = vrot.slane %v1427, %v1434
        %v1437 = vunpack.c.l.s4 1966171168
        %v1438 = vunpack.c.0.s8 %v1437
        %v1439 = vlaneseq
        %v1440 = vshrl.u32 %v1439, 7
        %v1441 = vsub.s32 %v1438, %v1440
        %v1442 = vrot.slane %v1428, %v1441
        %v1443 = vcombine.low %v1435, %v1442
        %v1445 = vunpack.c.l.s4 1966171168
        %v1446 = vunpack.c.0.s8 %v1445
        %v1447 = vlaneseq
        %v1448 = vshrl.u32 %v1447, 7
        %v1449 = vsub.s32 %v1446, %v1448
        %v1450 = vrot.slane %v1443, %v1449
        %v1452 = vadd.f32 %v1280, %v1450
        %v1453 = vxor.u32 %v1452, 2147483648
        %v1454 = vmul.f32 %v1453, 1.442695
        %v1455 = vpow.pop %v1454
        %v1456 = vadd.f32 %v1455, 1.0
        %v1457 = vrcp.pop %v1456
        %v1458 = vmul.f32 1.0, %v1457
        %v1460 = vrot.slane %v1452, 1
        %v1462 = vxor.u32 %v1460, 2147483648
        %v1463 = vmul.f32 %v1462, 1.442695
        %v1464 = vpow.pop %v1463
        %v1465 = vadd.f32 %v1464, 1.0
        %v1466 = vrcp.pop %v1465
        %v1467 = vmul.f32 1.0, %v1466
        %v1468 = vrot.slane %v1452, 2
        %v1470 = vtanh.pop %v1468
        %v1471 = vrot.slane %v1452, 3
        %v1473 = vxor.u32 %v1471, 2147483648
        %v1474 = vmul.f32 %v1473, 1.442695
        %v1475 = vpow.pop %v1474
        %v1476 = vadd.f32 %v1475, 1.0
        %v1477 = vrcp.pop %v1476
        %v1478 = vmul.f32 1.0, %v1477
        %v1479 = vmul.f32 %v1467, %v1273
        %v1480 = vmul.f32 %v1458, %v1470
        %v1481 = vadd.f32 %v1479, %v1480
        %v1482 = vtanh.pop %v1481
        %v1483 = vmul.f32 %v1478, %v1482
        %s1484 = scalar_lea.vmem [#allocation4], %s843
        %v1485 = vld [vmem:[%s1484] ss:$8 sm:$0xf]
        %s1486 = scalar_lea.vmem [#allocation7], %s832
        %v1487 = vld [vmem:[%s1486] ss:$8 sm:$0xf]
        %v1488 = vadd.f32 %v1485, %v1487
        %1489 = vmatprep.subr.mxu0 %v369
        %1490 = vmatpush1.msra.mxu0 %v368
        %1491 = vmatprep.subr.mxu0 %v365
        %1492 = vmatpush1.msra.mxu0 %v364
        %1493 = vmatprep.subr.mxu0 %v361
        %1494 = vmatpush1.msra.mxu0 %v360
        %1495 = vmatprep.subr.mxu0 %v357
        %1496 = vmatpush1.msra.mxu0 %v356
        %1497 = vmatprep.subr.mxu0 %v353
        %1498 = vmatpush1.msra.mxu0 %v352
        %1499 = vmatprep.subr.mxu0 %v349
        %1500 = vmatpush1.msra.mxu0 %v348
        %1501 = vmatprep.subr.mxu0 %v345
        %1502 = vmatpush1.msra.mxu0 %v344
        %1503 = vmatprep.subr.mxu0 %v341
        %1504 = vmatpush1.msra.mxu0 %v340
        %1505 = vmatprep.subr.mxu0 %v337
        %1506 = vmatpush1.msra.mxu0 %v336
        %1507 = vmatprep.subr.mxu0 %v333
        %1508 = vmatpush1.msra.mxu0 %v332
        %1509 = vmatprep.subr.mxu0 %v329
        %1510 = vmatpush1.msra.mxu0 %v328
        %1511 = vmatprep.subr.mxu0 %v325
        %1512 = vmatpush1.msra.mxu0 %v324
        %1513 = vmatprep.subr.mxu0 %v321
        %1514 = vmatpush1.msra.mxu0 %v320
        %1515 = vmatprep.subr.mxu0 %v317
        %1516 = vmatpush1.msra.mxu0 %v316
        %1517 = vmatprep.subr.mxu0 %v313
        %1518 = vmatpush1.msra.mxu0 %v312
        %1519 = vmatprep.subr.mxu0 %v309
        %1520 = vmatpush1.msra.mxu0 %v308
        %1521 = vmatprep.subr.mxu0 0.0
        %1522 = vmatpush2.msra.mxu0 0.0
        %1523 = vmatprep.subr.mxu0 0.0
        %1524 = vmatpush2.msra.mxu0 0.0
        %1525 = vmatprep.subr.mxu0 0.0
        %1526 = vmatpush2.msra.mxu0 0.0
        %1527 = vmatprep.subr.mxu0 0.0
        %1528 = vmatpush2.msra.mxu0 0.0
        %1529 = vmatprep.subr.mxu0 0.0
        %1530 = vmatpush2.msra.mxu0 0.0
        %1531 = vmatprep.subr.mxu0 0.0
        %1532 = vmatpush2.msra.mxu0 0.0
        %1533 = vmatprep.subr.mxu0 0.0
        %1534 = vmatpush2.msra.mxu0 0.0
        %1535 = vmatprep.subr.mxu0 0.0
        %1536 = vmatpush2.msra.mxu0 0.0
        %1537 = vmatprep.subr.mxu0 0.0
        %1538 = vmatpush2.msra.mxu0 0.0
        %1539 = vmatprep.subr.mxu0 0.0
        %1540 = vmatpush2.msra.mxu0 0.0
        %1541 = vmatprep.subr.mxu0 0.0
        %1542 = vmatpush2.msra.mxu0 0.0
        %1543 = vmatprep.subr.mxu0 0.0
        %1544 = vmatpush2.msra.mxu0 0.0
        %1545 = vmatprep.subr.mxu0 0.0
        %1546 = vmatpush2.msra.mxu0 0.0
        %1547 = vmatprep.subr.mxu0 0.0
        %1548 = vmatpush2.msra.mxu0 0.0
        %1549 = vmatprep.subr.mxu0 0.0
        %1550 = vmatpush2.msra.mxu0 0.0
        %1551 = vmatprep.subr.mxu0 0.0
        %1552 = vmatpush2.msra.mxu0 0.0
        %1553 = vmatprep.mubr.f32.mxu0 0.0
        %1554 = vmatmul.mubr.f32.gmra.mxu0 %v1483
        %v1555 = vpop.f32.mrf.mxu0
        %v1556 = vadd.f32 0.0, %v1555
        %v1557 = vpop.f32.mrf.mxu0
        %v1558 = vadd.f32 0.0, %v1557
        %1559 = vdwg.mxu0
        %1560 = vmatprep.subr.mxu0 %v371
        %1561 = vmatpush1.msra.mxu0 %v370
        %1562 = vmatprep.subr.mxu0 %v367
        %1563 = vmatpush1.msra.mxu0 %v366
        %1564 = vmatprep.subr.mxu0 %v363
        %1565 = vmatpush1.msra.mxu0 %v362
        %1566 = vmatprep.subr.mxu0 %v359
        %1567 = vmatpush1.msra.mxu0 %v358
        %1568 = vmatprep.subr.mxu0 %v355
        %1569 = vmatpush1.msra.mxu0 %v354
        %1570 = vmatprep.subr.mxu0 %v351
        %1571 = vmatpush1.msra.mxu0 %v350
        %1572 = vmatprep.subr.mxu0 %v347
        %1573 = vmatpush1.msra.mxu0 %v346
        %1574 = vmatprep.subr.mxu0 %v343
        %1575 = vmatpush1.msra.mxu0 %v342
        %1576 = vmatprep.subr.mxu0 %v339
        %1577 = vmatpush1.msra.mxu0 %v338
        %1578 = vmatprep.subr.mxu0 %v335
        %1579 = vmatpush1.msra.mxu0 %v334
        %1580 = vmatprep.subr.mxu0 %v331
        %1581 = vmatpush1.msra.mxu0 %v330
        %1582 = vmatprep.subr.mxu0 %v327
        %1583 = vmatpush1.msra.mxu0 %v326
        %1584 = vmatprep.subr.mxu0 %v323
        %1585 = vmatpush1.msra.mxu0 %v322
        %1586 = vmatprep.subr.mxu0 %v319
        %1587 = vmatpush1.msra.mxu0 %v318
        %1588 = vmatprep.subr.mxu0 %v315
        %1589 = vmatpush1.msra.mxu0 %v314
        %1590 = vmatprep.subr.mxu0 %v311
        %1591 = vmatpush1.msra.mxu0 %v310
        %1592 = vmatprep.subr.mxu0 0.0
        %1593 = vmatpush2.msra.mxu0 0.0
        %1594 = vmatprep.subr.mxu0 0.0
        %1595 = vmatpush2.msra.mxu0 0.0
        %1596 = vmatprep.subr.mxu0 0.0
        %1597 = vmatpush2.msra.mxu0 0.0
        %1598 = vmatprep.subr.mxu0 0.0
        %1599 = vmatpush2.msra.mxu0 0.0
        %1600 = vmatprep.subr.mxu0 0.0
        %1601 = vmatpush2.msra.mxu0 0.0
        %1602 = vmatprep.subr.mxu0 0.0
        %1603 = vmatpush2.msra.mxu0 0.0
        %1604 = vmatprep.subr.mxu0 0.0
        %1605 = vmatpush2.msra.mxu0 0.0
        %1606 = vmatprep.subr.mxu0 0.0
        %1607 = vmatpush2.msra.mxu0 0.0
        %1608 = vmatprep.subr.mxu0 0.0
        %1609 = vmatpush2.msra.mxu0 0.0
        %1610 = vmatprep.subr.mxu0 0.0
        %1611 = vmatpush2.msra.mxu0 0.0
        %1612 = vmatprep.subr.mxu0 0.0
        %1613 = vmatpush2.msra.mxu0 0.0
        %1614 = vmatprep.subr.mxu0 0.0
        %1615 = vmatpush2.msra.mxu0 0.0
        %1616 = vmatprep.subr.mxu0 0.0
        %1617 = vmatpush2.msra.mxu0 0.0
        %1618 = vmatprep.subr.mxu0 0.0
        %1619 = vmatpush2.msra.mxu0 0.0
        %1620 = vmatprep.subr.mxu0 0.0
        %1621 = vmatpush2.msra.mxu0 0.0
        %1622 = vmatprep.subr.mxu0 0.0
        %1623 = vmatpush2.msra.mxu0 0.0
        %1624 = vmatprep.mubr.f32.mxu0 0.0
        %1625 = vmatmul.mubr.f32.gmra.mxu0 %v1483
        %v1626 = vpop.f32.mrf.mxu0
        %v1627 = vadd.f32 0.0, %v1626
        %v1628 = vpop.f32.mrf.mxu0
        %v1629 = vadd.f32 0.0, %v1628
        %1630 = vdwg.mxu0
        %v1635 = vcombine.low %v1556, %v1558
        %v1636 = vcombine.low %v1627, %v1629
        %v1638 = vunpack.c.l.s4 1966171168
        %v1639 = vunpack.c.0.s8 %v1638
        %v1640 = vlaneseq
        %v1641 = vshrl.u32 %v1640, 7
        %v1642 = vsub.s32 %v1639, %v1641
        %v1643 = vrot.slane %v1635, %v1642
        %v1645 = vunpack.c.l.s4 1966171168
        %v1646 = vunpack.c.0.s8 %v1645
        %v1647 = vlaneseq
        %v1648 = vshrl.u32 %v1647, 7
        %v1649 = vsub.s32 %v1646, %v1648
        %v1650 = vrot.slane %v1636, %v1649
        %v1651 = vcombine.low %v1643, %v1650
        %v1653 = vunpack.c.l.s4 1966171168
        %v1654 = vunpack.c.0.s8 %v1653
        %v1655 = vlaneseq
        %v1656 = vshrl.u32 %v1655, 7
        %v1657 = vsub.s32 %v1654, %v1656
        %v1658 = vrot.slane %v1651, %v1657
        %v1660 = vadd.f32 %v1488, %v1658
        %v1661 = vxor.u32 %v1660, 2147483648
        %v1662 = vmul.f32 %v1661, 1.442695
        %v1663 = vpow.pop %v1662
        %v1664 = vadd.f32 %v1663, 1.0
        %v1665 = vrcp.pop %v1664
        %v1666 = vmul.f32 1.0, %v1665
        %v1668 = vrot.slane %v1660, 1
        %v1670 = vxor.u32 %v1668, 2147483648
        %v1671 = vmul.f32 %v1670, 1.442695
        %v1672 = vpow.pop %v1671
        %v1673 = vadd.f32 %v1672, 1.0
        %v1674 = vrcp.pop %v1673
        %v1675 = vmul.f32 1.0, %v1674
        %v1676 = vrot.slane %v1660, 2
        %v1678 = vtanh.pop %v1676
        %v1679 = vrot.slane %v1660, 3
        %v1681 = vxor.u32 %v1679, 2147483648
        %v1682 = vmul.f32 %v1681, 1.442695
        %v1683 = vpow.pop %v1682
        %v1684 = vadd.f32 %v1683, 1.0
        %v1685 = vrcp.pop %v1684
        %v1686 = vmul.f32 1.0, %v1685
        %v1687 = vmul.f32 %v1675, %v1481
        %v1688 = vmul.f32 %v1666, %v1678
        %v1689 = vadd.f32 %v1687, %v1688
        %v1690 = vtanh.pop %v1689
        %v1691 = vmul.f32 %v1686, %v1690
        %s1692 = scalar_lea.vmem [#allocation4], %s617
        %v1693 = vld [vmem:[%s1692] ss:$8 sm:$0xf]
        %s1694 = scalar_lea.vmem [#allocation7], %s606
        %v1695 = vld [vmem:[%s1694] ss:$8 sm:$0xf]
        %v1696 = vadd.f32 %v1693, %v1695
        %1697 = vmatprep.subr.mxu0 %v369
        %1698 = vmatpush1.msra.mxu0 %v368
        %1699 = vmatprep.subr.mxu0 %v365
        %1700 = vmatpush1.msra.mxu0 %v364
        %1701 = vmatprep.subr.mxu0 %v361
        %1702 = vmatpush1.msra.mxu0 %v360
        %1703 = vmatprep.subr.mxu0 %v357
        %1704 = vmatpush1.msra.mxu0 %v356
        %1705 = vmatprep.subr.mxu0 %v353
        %1706 = vmatpush1.msra.mxu0 %v352
        %1707 = vmatprep.subr.mxu0 %v349
        %1708 = vmatpush1.msra.mxu0 %v348
        %1709 = vmatprep.subr.mxu0 %v345
        %1710 = vmatpush1.msra.mxu0 %v344
        %1711 = vmatprep.subr.mxu0 %v341
        %1712 = vmatpush1.msra.mxu0 %v340
        %1713 = vmatprep.subr.mxu0 %v337
        %1714 = vmatpush1.msra.mxu0 %v336
        %1715 = vmatprep.subr.mxu0 %v333
        %1716 = vmatpush1.msra.mxu0 %v332
        %1717 = vmatprep.subr.mxu0 %v329
        %1718 = vmatpush1.msra.mxu0 %v328
        %1719 = vmatprep.subr.mxu0 %v325
        %1720 = vmatpush1.msra.mxu0 %v324
        %1721 = vmatprep.subr.mxu0 %v321
        %1722 = vmatpush1.msra.mxu0 %v320
        %1723 = vmatprep.subr.mxu0 %v317
        %1724 = vmatpush1.msra.mxu0 %v316
        %1725 = vmatprep.subr.mxu0 %v313
        %1726 = vmatpush1.msra.mxu0 %v312
        %1727 = vmatprep.subr.mxu0 %v309
        %1728 = vmatpush1.msra.mxu0 %v308
        %1729 = vmatprep.subr.mxu0 0.0
        %1730 = vmatpush2.msra.mxu0 0.0
        %1731 = vmatprep.subr.mxu0 0.0
        %1732 = vmatpush2.msra.mxu0 0.0
        %1733 = vmatprep.subr.mxu0 0.0
        %1734 = vmatpush2.msra.mxu0 0.0
        %1735 = vmatprep.subr.mxu0 0.0
        %1736 = vmatpush2.msra.mxu0 0.0
        %1737 = vmatprep.subr.mxu0 0.0
        %1738 = vmatpush2.msra.mxu0 0.0
        %1739 = vmatprep.subr.mxu0 0.0
        %1740 = vmatpush2.msra.mxu0 0.0
        %1741 = vmatprep.subr.mxu0 0.0
        %1742 = vmatpush2.msra.mxu0 0.0
        %1743 = vmatprep.subr.mxu0 0.0
        %1744 = vmatpush2.msra.mxu0 0.0
        %1745 = vmatprep.subr.mxu0 0.0
        %1746 = vmatpush2.msra.mxu0 0.0
        %1747 = vmatprep.subr.mxu0 0.0
        %1748 = vmatpush2.msra.mxu0 0.0
        %1749 = vmatprep.subr.mxu0 0.0
        %1750 = vmatpush2.msra.mxu0 0.0
        %1751 = vmatprep.subr.mxu0 0.0
        %1752 = vmatpush2.msra.mxu0 0.0
        %1753 = vmatprep.subr.mxu0 0.0
        %1754 = vmatpush2.msra.mxu0 0.0
        %1755 = vmatprep.subr.mxu0 0.0
        %1756 = vmatpush2.msra.mxu0 0.0
        %1757 = vmatprep.subr.mxu0 0.0
        %1758 = vmatpush2.msra.mxu0 0.0
        %1759 = vmatprep.subr.mxu0 0.0
        %1760 = vmatpush2.msra.mxu0 0.0
        %1761 = vmatprep.mubr.f32.mxu0 0.0
        %1762 = vmatmul.mubr.f32.gmra.mxu0 %v1691
        %v1763 = vpop.f32.mrf.mxu0
        %v1764 = vadd.f32 0.0, %v1763
        %v1765 = vpop.f32.mrf.mxu0
        %v1766 = vadd.f32 0.0, %v1765
        %1767 = vdwg.mxu0
        %1768 = vmatprep.subr.mxu0 %v371
        %1769 = vmatpush1.msra.mxu0 %v370
        %1770 = vmatprep.subr.mxu0 %v367
        %1771 = vmatpush1.msra.mxu0 %v366
        %1772 = vmatprep.subr.mxu0 %v363
        %1773 = vmatpush1.msra.mxu0 %v362
        %1774 = vmatprep.subr.mxu0 %v359
        %1775 = vmatpush1.msra.mxu0 %v358
        %1776 = vmatprep.subr.mxu0 %v355
        %1777 = vmatpush1.msra.mxu0 %v354
        %1778 = vmatprep.subr.mxu0 %v351
        %1779 = vmatpush1.msra.mxu0 %v350
        %1780 = vmatprep.subr.mxu0 %v347
        %1781 = vmatpush1.msra.mxu0 %v346
        %1782 = vmatprep.subr.mxu0 %v343
        %1783 = vmatpush1.msra.mxu0 %v342
        %1784 = vmatprep.subr.mxu0 %v339
        %1785 = vmatpush1.msra.mxu0 %v338
        %1786 = vmatprep.subr.mxu0 %v335
        %1787 = vmatpush1.msra.mxu0 %v334
        %1788 = vmatprep.subr.mxu0 %v331
        %1789 = vmatpush1.msra.mxu0 %v330
        %1790 = vmatprep.subr.mxu0 %v327
        %1791 = vmatpush1.msra.mxu0 %v326
        %1792 = vmatprep.subr.mxu0 %v323
        %1793 = vmatpush1.msra.mxu0 %v322
        %1794 = vmatprep.subr.mxu0 %v319
        %1795 = vmatpush1.msra.mxu0 %v318
        %1796 = vmatprep.subr.mxu0 %v315
        %1797 = vmatpush1.msra.mxu0 %v314
        %1798 = vmatprep.subr.mxu0 %v311
        %1799 = vmatpush1.msra.mxu0 %v310
        %1800 = vmatprep.subr.mxu0 0.0
        %1801 = vmatpush2.msra.mxu0 0.0
        %1802 = vmatprep.subr.mxu0 0.0
        %1803 = vmatpush2.msra.mxu0 0.0
        %1804 = vmatprep.subr.mxu0 0.0
        %1805 = vmatpush2.msra.mxu0 0.0
        %1806 = vmatprep.subr.mxu0 0.0
        %1807 = vmatpush2.msra.mxu0 0.0
        %1808 = vmatprep.subr.mxu0 0.0
        %1809 = vmatpush2.msra.mxu0 0.0
        %1810 = vmatprep.subr.mxu0 0.0
        %1811 = vmatpush2.msra.mxu0 0.0
        %1812 = vmatprep.subr.mxu0 0.0
        %1813 = vmatpush2.msra.mxu0 0.0
        %1814 = vmatprep.subr.mxu0 0.0
        %1815 = vmatpush2.msra.mxu0 0.0
        %1816 = vmatprep.subr.mxu0 0.0
        %1817 = vmatpush2.msra.mxu0 0.0
        %1818 = vmatprep.subr.mxu0 0.0
        %1819 = vmatpush2.msra.mxu0 0.0
        %1820 = vmatprep.subr.mxu0 0.0
        %1821 = vmatpush2.msra.mxu0 0.0
        %1822 = vmatprep.subr.mxu0 0.0
        %1823 = vmatpush2.msra.mxu0 0.0
        %1824 = vmatprep.subr.mxu0 0.0
        %1825 = vmatpush2.msra.mxu0 0.0
        %1826 = vmatprep.subr.mxu0 0.0
        %1827 = vmatpush2.msra.mxu0 0.0
        %1828 = vmatprep.subr.mxu0 0.0
        %1829 = vmatpush2.msra.mxu0 0.0
        %1830 = vmatprep.subr.mxu0 0.0
        %1831 = vmatpush2.msra.mxu0 0.0
        %1832 = vmatprep.mubr.f32.mxu0 0.0
        %1833 = vmatmul.mubr.f32.gmra.mxu0 %v1691
        %v1834 = vpop.f32.mrf.mxu0
        %v1835 = vadd.f32 0.0, %v1834
        %v1836 = vpop.f32.mrf.mxu0
        %v1837 = vadd.f32 0.0, %v1836
        %1838 = vdwg.mxu0
        %v1843 = vcombine.low %v1764, %v1766
        %v1844 = vcombine.low %v1835, %v1837
        %v1846 = vunpack.c.l.s4 1966171168
        %v1847 = vunpack.c.0.s8 %v1846
        %v1848 = vlaneseq
        %v1849 = vshrl.u32 %v1848, 7
        %v1850 = vsub.s32 %v1847, %v1849
        %v1851 = vrot.slane %v1843, %v1850
        %v1853 = vunpack.c.l.s4 1966171168
        %v1854 = vunpack.c.0.s8 %v1853
        %v1855 = vlaneseq
        %v1856 = vshrl.u32 %v1855, 7
        %v1857 = vsub.s32 %v1854, %v1856
        %v1858 = vrot.slane %v1844, %v1857
        %v1859 = vcombine.low %v1851, %v1858
        %v1861 = vunpack.c.l.s4 1966171168
        %v1862 = vunpack.c.0.s8 %v1861
        %v1863 = vlaneseq
        %v1864 = vshrl.u32 %v1863, 7
        %v1865 = vsub.s32 %v1862, %v1864
        %v1866 = vrot.slane %v1859, %v1865
        %v1868 = vadd.f32 %v1696, %v1866
        %v1869 = vxor.u32 %v1868, 2147483648
        %v1870 = vmul.f32 %v1869, 1.442695
        %v1871 = vpow.pop %v1870
        %v1872 = vadd.f32 %v1871, 1.0
        %v1873 = vrcp.pop %v1872
        %v1874 = vmul.f32 1.0, %v1873
        %v1876 = vrot.slane %v1868, 1
        %v1878 = vxor.u32 %v1876, 2147483648
        %v1879 = vmul.f32 %v1878, 1.442695
        %v1880 = vpow.pop %v1879
        %v1881 = vadd.f32 %v1880, 1.0
        %v1882 = vrcp.pop %v1881
        %v1883 = vmul.f32 1.0, %v1882
        %v1884 = vrot.slane %v1868, 2
        %v1886 = vtanh.pop %v1884
        %v1887 = vrot.slane %v1868, 3
        %v1889 = vxor.u32 %v1887, 2147483648
        %v1890 = vmul.f32 %v1889, 1.442695
        %v1891 = vpow.pop %v1890
        %v1892 = vadd.f32 %v1891, 1.0
        %v1893 = vrcp.pop %v1892
        %v1894 = vmul.f32 1.0, %v1893
        %v1895 = vmul.f32 %v1883, %v1689
        %v1896 = vmul.f32 %v1874, %v1886
        %v1897 = vadd.f32 %v1895, %v1896
        %v1898 = vtanh.pop %v1897
        %v1899 = vmul.f32 %v1894, %v1898
        %s1900 = scalar_lea.vmem [#allocation4], %s391
        %v1901 = vld [vmem:[%s1900] ss:$8 sm:$0xf]
        %s1902 = scalar_lea.vmem [#allocation7], %s380
        %v1903 = vld [vmem:[%s1902] ss:$8 sm:$0xf]
        %v1904 = vadd.f32 %v1901, %v1903
        %1905 = vmatprep.subr.mxu0 %v369
        %1906 = vmatpush1.msra.mxu0 %v368
        %1907 = vmatprep.subr.mxu0 %v365
        %1908 = vmatpush1.msra.mxu0 %v364
        %1909 = vmatprep.subr.mxu0 %v361
        %1910 = vmatpush1.msra.mxu0 %v360
        %1911 = vmatprep.subr.mxu0 %v357
        %1912 = vmatpush1.msra.mxu0 %v356
        %1913 = vmatprep.subr.mxu0 %v353
        %1914 = vmatpush1.msra.mxu0 %v352
        %1915 = vmatprep.subr.mxu0 %v349
        %1916 = vmatpush1.msra.mxu0 %v348
        %1917 = vmatprep.subr.mxu0 %v345
        %1918 = vmatpush1.msra.mxu0 %v344
        %1919 = vmatprep.subr.mxu0 %v341
        %1920 = vmatpush1.msra.mxu0 %v340
        %1921 = vmatprep.subr.mxu0 %v337
        %1922 = vmatpush1.msra.mxu0 %v336
        %1923 = vmatprep.subr.mxu0 %v333
        %1924 = vmatpush1.msra.mxu0 %v332
        %1925 = vmatprep.subr.mxu0 %v329
        %1926 = vmatpush1.msra.mxu0 %v328
        %1927 = vmatprep.subr.mxu0 %v325
        %1928 = vmatpush1.msra.mxu0 %v324
        %1929 = vmatprep.subr.mxu0 %v321
        %1930 = vmatpush1.msra.mxu0 %v320
        %1931 = vmatprep.subr.mxu0 %v317
        %1932 = vmatpush1.msra.mxu0 %v316
        %1933 = vmatprep.subr.mxu0 %v313
        %1934 = vmatpush1.msra.mxu0 %v312
        %1935 = vmatprep.subr.mxu0 %v309
        %1936 = vmatpush1.msra.mxu0 %v308
        %1937 = vmatprep.subr.mxu0 0.0
        %1938 = vmatpush2.msra.mxu0 0.0
        %1939 = vmatprep.subr.mxu0 0.0
        %1940 = vmatpush2.msra.mxu0 0.0
        %1941 = vmatprep.subr.mxu0 0.0
        %1942 = vmatpush2.msra.mxu0 0.0
        %1943 = vmatprep.subr.mxu0 0.0
        %1944 = vmatpush2.msra.mxu0 0.0
        %1945 = vmatprep.subr.mxu0 0.0
        %1946 = vmatpush2.msra.mxu0 0.0
        %1947 = vmatprep.subr.mxu0 0.0
        %1948 = vmatpush2.msra.mxu0 0.0
        %1949 = vmatprep.subr.mxu0 0.0
        %1950 = vmatpush2.msra.mxu0 0.0
        %1951 = vmatprep.subr.mxu0 0.0
        %1952 = vmatpush2.msra.mxu0 0.0
        %1953 = vmatprep.subr.mxu0 0.0
        %1954 = vmatpush2.msra.mxu0 0.0
        %1955 = vmatprep.subr.mxu0 0.0
        %1956 = vmatpush2.msra.mxu0 0.0
        %1957 = vmatprep.subr.mxu0 0.0
        %1958 = vmatpush2.msra.mxu0 0.0
        %1959 = vmatprep.subr.mxu0 0.0
        %1960 = vmatpush2.msra.mxu0 0.0
        %1961 = vmatprep.subr.mxu0 0.0
        %1962 = vmatpush2.msra.mxu0 0.0
        %1963 = vmatprep.subr.mxu0 0.0
        %1964 = vmatpush2.msra.mxu0 0.0
        %1965 = vmatprep.subr.mxu0 0.0
        %1966 = vmatpush2.msra.mxu0 0.0
        %1967 = vmatprep.subr.mxu0 0.0
        %1968 = vmatpush2.msra.mxu0 0.0
        %1969 = vmatprep.mubr.f32.mxu0 0.0
        %1970 = vmatmul.mubr.f32.gmra.mxu0 %v1899
        %v1971 = vpop.f32.mrf.mxu0
        %v1972 = vadd.f32 0.0, %v1971
        %v1973 = vpop.f32.mrf.mxu0
        %v1974 = vadd.f32 0.0, %v1973
        %1975 = vdwg.mxu0
        %1976 = vmatprep.subr.mxu0 %v371
        %1977 = vmatpush1.msra.mxu0 %v370
        %1978 = vmatprep.subr.mxu0 %v367
        %1979 = vmatpush1.msra.mxu0 %v366
        %1980 = vmatprep.subr.mxu0 %v363
        %1981 = vmatpush1.msra.mxu0 %v362
        %1982 = vmatprep.subr.mxu0 %v359
        %1983 = vmatpush1.msra.mxu0 %v358
        %1984 = vmatprep.subr.mxu0 %v355
        %1985 = vmatpush1.msra.mxu0 %v354
        %1986 = vmatprep.subr.mxu0 %v351
        %1987 = vmatpush1.msra.mxu0 %v350
        %1988 = vmatprep.subr.mxu0 %v347
        %1989 = vmatpush1.msra.mxu0 %v346
        %1990 = vmatprep.subr.mxu0 %v343
        %1991 = vmatpush1.msra.mxu0 %v342
        %1992 = vmatprep.subr.mxu0 %v339
        %1993 = vmatpush1.msra.mxu0 %v338
        %1994 = vmatprep.subr.mxu0 %v335
        %1995 = vmatpush1.msra.mxu0 %v334
        %1996 = vmatprep.subr.mxu0 %v331
        %1997 = vmatpush1.msra.mxu0 %v330
        %1998 = vmatprep.subr.mxu0 %v327
        %1999 = vmatpush1.msra.mxu0 %v326
        %2000 = vmatprep.subr.mxu0 %v323
        %2001 = vmatpush1.msra.mxu0 %v322
        %2002 = vmatprep.subr.mxu0 %v319
        %2003 = vmatpush1.msra.mxu0 %v318
        %2004 = vmatprep.subr.mxu0 %v315
        %2005 = vmatpush1.msra.mxu0 %v314
        %2006 = vmatprep.subr.mxu0 %v311
        %2007 = vmatpush1.msra.mxu0 %v310
        %2008 = vmatprep.subr.mxu0 0.0
        %2009 = vmatpush2.msra.mxu0 0.0
        %2010 = vmatprep.subr.mxu0 0.0
        %2011 = vmatpush2.msra.mxu0 0.0
        %2012 = vmatprep.subr.mxu0 0.0
        %2013 = vmatpush2.msra.mxu0 0.0
        %2014 = vmatprep.subr.mxu0 0.0
        %2015 = vmatpush2.msra.mxu0 0.0
        %2016 = vmatprep.subr.mxu0 0.0
        %2017 = vmatpush2.msra.mxu0 0.0
        %2018 = vmatprep.subr.mxu0 0.0
        %2019 = vmatpush2.msra.mxu0 0.0
        %2020 = vmatprep.subr.mxu0 0.0
        %2021 = vmatpush2.msra.mxu0 0.0
        %2022 = vmatprep.subr.mxu0 0.0
        %2023 = vmatpush2.msra.mxu0 0.0
        %2024 = vmatprep.subr.mxu0 0.0
        %2025 = vmatpush2.msra.mxu0 0.0
        %2026 = vmatprep.subr.mxu0 0.0
        %2027 = vmatpush2.msra.mxu0 0.0
        %2028 = vmatprep.subr.mxu0 0.0
        %2029 = vmatpush2.msra.mxu0 0.0
        %2030 = vmatprep.subr.mxu0 0.0
        %2031 = vmatpush2.msra.mxu0 0.0
        %2032 = vmatprep.subr.mxu0 0.0
        %2033 = vmatpush2.msra.mxu0 0.0
        %2034 = vmatprep.subr.mxu0 0.0
        %2035 = vmatpush2.msra.mxu0 0.0
        %2036 = vmatprep.subr.mxu0 0.0
        %2037 = vmatpush2.msra.mxu0 0.0
        %2038 = vmatprep.subr.mxu0 0.0
        %2039 = vmatpush2.msra.mxu0 0.0
        %2040 = vmatprep.mubr.f32.mxu0 0.0
        %2041 = vmatmul.mubr.f32.gmra.mxu0 %v1899
        %v2042 = vpop.f32.mrf.mxu0
        %v2043 = vadd.f32 0.0, %v2042
        %v2044 = vpop.f32.mrf.mxu0
        %v2045 = vadd.f32 0.0, %v2044
        %2046 = vdwg.mxu0
        %v2051 = vcombine.low %v1972, %v1974
        %v2052 = vcombine.low %v2043, %v2045
        %v2054 = vunpack.c.l.s4 1966171168
        %v2055 = vunpack.c.0.s8 %v2054
        %v2056 = vlaneseq
        %v2057 = vshrl.u32 %v2056, 7
        %v2058 = vsub.s32 %v2055, %v2057
        %v2059 = vrot.slane %v2051, %v2058
        %v2061 = vunpack.c.l.s4 1966171168
        %v2062 = vunpack.c.0.s8 %v2061
        %v2063 = vlaneseq
        %v2064 = vshrl.u32 %v2063, 7
        %v2065 = vsub.s32 %v2062, %v2064
        %v2066 = vrot.slane %v2052, %v2065
        %v2067 = vcombine.low %v2059, %v2066
        %v2069 = vunpack.c.l.s4 1966171168
        %v2070 = vunpack.c.0.s8 %v2069
        %v2071 = vlaneseq
        %v2072 = vshrl.u32 %v2071, 7
        %v2073 = vsub.s32 %v2070, %v2072
        %v2074 = vrot.slane %v2067, %v2073
        %v2076 = vadd.f32 %v1904, %v2074
        %v2077 = vxor.u32 %v2076, 2147483648
        %v2078 = vmul.f32 %v2077, 1.442695
        %v2079 = vpow.pop %v2078
        %v2080 = vadd.f32 %v2079, 1.0
        %v2081 = vrcp.pop %v2080
        %v2082 = vmul.f32 1.0, %v2081
        %v2084 = vrot.slane %v2076, 1
        %v2086 = vxor.u32 %v2084, 2147483648
        %v2087 = vmul.f32 %v2086, 1.442695
        %v2088 = vpow.pop %v2087
        %v2089 = vadd.f32 %v2088, 1.0
        %v2090 = vrcp.pop %v2089
        %v2091 = vmul.f32 1.0, %v2090
        %v2092 = vrot.slane %v2076, 2
        %v2094 = vtanh.pop %v2092
        %v2095 = vrot.slane %v2076, 3
        %v2097 = vxor.u32 %v2095, 2147483648
        %v2098 = vmul.f32 %v2097, 1.442695
        %v2099 = vpow.pop %v2098
        %v2100 = vadd.f32 %v2099, 1.0
        %v2101 = vrcp.pop %v2100
        %v2102 = vmul.f32 1.0, %v2101
        %v2103 = vmul.f32 %v2091, %v1897
        %v2104 = vmul.f32 %v2082, %v2094
        %v2105 = vadd.f32 %v2103, %v2104
        %v2106 = vtanh.pop %v2105
        %v2107 = vmul.f32 %v2102, %v2106
        %v2109 = vlaneseq
        %v2110 = vshrl.u32 %v2109, 7
        %v2111 = vsub.s32 0, %v2110
        %v2112 = vrot.slane %v823, %v2111
        %v2115 = vlaneseq
        %v2116 = vshrl.u32 %v2115, 7
        %v2117 = vsub.s32 0, %v2116
        %v2118 = vrot.slane %v1049, %v2117
        %v2121 = vlaneseq
        %v2122 = vshrl.u32 %v2121, 7
        %v2123 = vsub.s32 0, %v2122
        %v2124 = vrot.slane %v1275, %v2123
        %v2127 = vlaneseq
        %v2128 = vshrl.u32 %v2127, 7
        %v2129 = vsub.s32 0, %v2128
        %v2130 = vrot.slane %v1483, %v2129
        %v2133 = vlaneseq
        %v2134 = vshrl.u32 %v2133, 7
        %v2135 = vsub.s32 0, %v2134
        %v2136 = vrot.slane %v1691, %v2135
        %v2139 = vlaneseq
        %v2140 = vshrl.u32 %v2139, 7
        %v2141 = vsub.s32 0, %v2140
        %v2142 = vrot.slane %v1899, %v2141
        %v2145 = vlaneseq
        %v2146 = vshrl.u32 %v2145, 7
        %v2147 = vsub.s32 0, %v2146
        %v2148 = vrot.slane %v2107, %v2147
        %vm2150 = vcmask 1040384
        %v2151 = vsel %vm2150, %v597, %v2112
        %vm2152 = vcmask 1041408
        %v2153 = vsel %vm2152, %v2151, %v2118
        %vm2154 = vcmask 1042432
        %v2155 = vsel %vm2154, %v2153, %v2124
        %vm2156 = vcmask 1043456
        %v2157 = vsel %vm2156, %v2155, %v2130
        %vm2158 = vcmask 1044480
        %v2159 = vsel %vm2158, %v2157, %v2136
        %vm2160 = vcmask 1045504
        %v2161 = vsel %vm2160, %v2159, %v2142
        %vm2162 = vcmask 1046528
        %v2163 = vsel %vm2162, %v2161, %v2148
        %v2165 = vlaneseq
        %v2166 = vshrl.u32 %v2165, 7
        %v2167 = vsub.s32 0, %v2166
        %v2168 = vrot.slane %v597, %v2167
        %v2170 = vsel %vm2150, %v2107, %v2142
        %v2171 = vsel %vm2152, %v2170, %v2136
        %v2172 = vsel %vm2154, %v2171, %v2130
        %v2173 = vsel %vm2156, %v2172, %v2124
        %v2174 = vsel %vm2158, %v2173, %v2118
        %v2175 = vsel %vm2160, %v2174, %v2112
        %v2176 = vsel %vm2162, %v2175, %v2168
        %v2177 = vld [vmem:[#allocation10] sm:$0xff]
        %v2178 = vld [vmem:[#allocation10 + $0x8] sm:$0xff]
        %v2179 = vld [vmem:[#allocation10 + $0x10] sm:$0xff]
        %v2180 = vld [vmem:[#allocation10 + $0x18] sm:$0xff]
        %v2181 = vld [vmem:[#allocation10 + $0x20] sm:$0xff]
        %v2182 = vld [vmem:[#allocation10 + $0x28] sm:$0xff]
        %v2183 = vld [vmem:[#allocation10 + $0x30] sm:$0xff]
        %v2184 = vld [vmem:[#allocation10 + $0x38] sm:$0xff]
        %v2185 = vld [vmem:[#allocation10 + $0x40] sm:$0xff]
        %v2186 = vld [vmem:[#allocation10 + $0x48] sm:$0xff]
        %v2187 = vld [vmem:[#allocation10 + $0x50] sm:$0xff]
        %v2188 = vld [vmem:[#allocation10 + $0x58] sm:$0xff]
        %v2189 = vld [vmem:[#allocation10 + $0x60] sm:$0xff]
        %v2190 = vld [vmem:[#allocation10 + $0x68] sm:$0xff]
        %v2191 = vld [vmem:[#allocation10 + $0x70] sm:$0xff]
        %v2192 = vld [vmem:[#allocation10 + $0x78] sm:$0xff]
        %v2193 = vld [vmem:[#allocation12] sm:$0xff]
        %v2194 = vld [vmem:[#allocation12 + $0x8] sm:$0xff]
        %v2195 = vld [vmem:[#allocation12 + $0x10] sm:$0xff]
        %v2196 = vld [vmem:[#allocation12 + $0x18] sm:$0xff]
        %v2197 = vld [vmem:[#allocation12 + $0x20] sm:$0xff]
        %v2198 = vld [vmem:[#allocation12 + $0x28] sm:$0xff]
        %v2199 = vld [vmem:[#allocation12 + $0x30] sm:$0xff]
        %v2200 = vld [vmem:[#allocation12 + $0x38] sm:$0xff]
        %v2201 = vld [vmem:[#allocation12 + $0x40] sm:$0xff]
        %v2202 = vld [vmem:[#allocation12 + $0x48] sm:$0xff]
        %v2203 = vld [vmem:[#allocation12 + $0x50] sm:$0xff]
        %v2204 = vld [vmem:[#allocation12 + $0x58] sm:$0xff]
        %v2205 = vld [vmem:[#allocation12 + $0x60] sm:$0xff]
        %v2206 = vld [vmem:[#allocation12 + $0x68] sm:$0xff]
        %v2207 = vld [vmem:[#allocation12 + $0x70] sm:$0xff]
        %v2208 = vld [vmem:[#allocation12 + $0x78] sm:$0xff]
        %2209 = vmatprep.subr.mxu0 0.0
        %2210 = vmatpush1.msra.mxu0 %v2208
        %2211 = vmatprep.subr.mxu0 0.0
        %2212 = vmatpush1.msra.mxu0 %v2207
        %2213 = vmatprep.subr.mxu0 0.0
        %2214 = vmatpush1.msra.mxu0 %v2206
        %2215 = vmatprep.subr.mxu0 0.0
        %2216 = vmatpush1.msra.mxu0 %v2205
        %2217 = vmatprep.subr.mxu0 0.0
        %2218 = vmatpush1.msra.mxu0 %v2204
        %2219 = vmatprep.subr.mxu0 0.0
        %2220 = vmatpush1.msra.mxu0 %v2203
        %2221 = vmatprep.subr.mxu0 0.0
        %2222 = vmatpush1.msra.mxu0 %v2202
        %2223 = vmatprep.subr.mxu0 0.0
        %2224 = vmatpush1.msra.mxu0 %v2201
        %2225 = vmatprep.subr.mxu0 0.0
        %2226 = vmatpush1.msra.mxu0 %v2200
        %2227 = vmatprep.subr.mxu0 0.0
        %2228 = vmatpush1.msra.mxu0 %v2199
        %2229 = vmatprep.subr.mxu0 0.0
        %2230 = vmatpush1.msra.mxu0 %v2198
        %2231 = vmatprep.subr.mxu0 0.0
        %2232 = vmatpush1.msra.mxu0 %v2197
        %2233 = vmatprep.subr.mxu0 0.0
        %2234 = vmatpush1.msra.mxu0 %v2196
        %2235 = vmatprep.subr.mxu0 0.0
        %2236 = vmatpush1.msra.mxu0 %v2195
        %2237 = vmatprep.subr.mxu0 0.0
        %2238 = vmatpush1.msra.mxu0 %v2194
        %2239 = vmatprep.subr.mxu0 0.0
        %2240 = vmatpush1.msra.mxu0 %v2193
        %2241 = vmatprep.subr.mxu0 0.0
        %2242 = vmatpush2.msra.mxu0 0.0
        %2243 = vmatprep.subr.mxu0 0.0
        %2244 = vmatpush2.msra.mxu0 0.0
        %2245 = vmatprep.subr.mxu0 0.0
        %2246 = vmatpush2.msra.mxu0 0.0
        %2247 = vmatprep.subr.mxu0 0.0
        %2248 = vmatpush2.msra.mxu0 0.0
        %2249 = vmatprep.subr.mxu0 0.0
        %2250 = vmatpush2.msra.mxu0 0.0
        %2251 = vmatprep.subr.mxu0 0.0
        %2252 = vmatpush2.msra.mxu0 0.0
        %2253 = vmatprep.subr.mxu0 0.0
        %2254 = vmatpush2.msra.mxu0 0.0
        %2255 = vmatprep.subr.mxu0 0.0
        %2256 = vmatpush2.msra.mxu0 0.0
        %2257 = vmatprep.subr.mxu0 0.0
        %2258 = vmatpush2.msra.mxu0 0.0
        %2259 = vmatprep.subr.mxu0 0.0
        %2260 = vmatpush2.msra.mxu0 0.0
        %2261 = vmatprep.subr.mxu0 0.0
        %2262 = vmatpush2.msra.mxu0 0.0
        %2263 = vmatprep.subr.mxu0 0.0
        %2264 = vmatpush2.msra.mxu0 0.0
        %2265 = vmatprep.subr.mxu0 0.0
        %2266 = vmatpush2.msra.mxu0 0.0
        %2267 = vmatprep.subr.mxu0 0.0
        %2268 = vmatpush2.msra.mxu0 0.0
        %2269 = vmatprep.subr.mxu0 0.0
        %2270 = vmatpush2.msra.mxu0 0.0
        %2271 = vmatprep.subr.mxu0 0.0
        %2272 = vmatpush2.msra.mxu0 0.0
        %2273 = vmatprep.mubr.f32.mxu0 0.0
        %2274 = vmatmul.mubr.f32.gmra.mxu0 %v2176
        %v2275 = vpop.f32.mrf.mxu0
        %v2276 = vadd.f32 0.0, %v2275
        %v2277 = vpop.f32.mrf.mxu0
        %2278 = vdwg.mxu0
        %2279 = vmatprep.subr.mxu0 0.0
        %2280 = vmatpush1.msra.mxu0 %v2192
        %2281 = vmatprep.subr.mxu0 0.0
        %2282 = vmatpush1.msra.mxu0 %v2191
        %2283 = vmatprep.subr.mxu0 0.0
        %2284 = vmatpush1.msra.mxu0 %v2190
        %2285 = vmatprep.subr.mxu0 0.0
        %2286 = vmatpush1.msra.mxu0 %v2189
        %2287 = vmatprep.subr.mxu0 0.0
        %2288 = vmatpush1.msra.mxu0 %v2188
        %2289 = vmatprep.subr.mxu0 0.0
        %2290 = vmatpush1.msra.mxu0 %v2187
        %2291 = vmatprep.subr.mxu0 0.0
        %2292 = vmatpush1.msra.mxu0 %v2186
        %2293 = vmatprep.subr.mxu0 0.0
        %2294 = vmatpush1.msra.mxu0 %v2185
        %2295 = vmatprep.subr.mxu0 0.0
        %2296 = vmatpush1.msra.mxu0 %v2184
        %2297 = vmatprep.subr.mxu0 0.0
        %2298 = vmatpush1.msra.mxu0 %v2183
        %2299 = vmatprep.subr.mxu0 0.0
        %2300 = vmatpush1.msra.mxu0 %v2182
        %2301 = vmatprep.subr.mxu0 0.0
        %2302 = vmatpush1.msra.mxu0 %v2181
        %2303 = vmatprep.subr.mxu0 0.0
        %2304 = vmatpush1.msra.mxu0 %v2180
        %2305 = vmatprep.subr.mxu0 0.0
        %2306 = vmatpush1.msra.mxu0 %v2179
        %2307 = vmatprep.subr.mxu0 0.0
        %2308 = vmatpush1.msra.mxu0 %v2178
        %2309 = vmatprep.subr.mxu0 0.0
        %2310 = vmatpush1.msra.mxu0 %v2177
        %2311 = vmatprep.subr.mxu0 0.0
        %2312 = vmatpush2.msra.mxu0 0.0
        %2313 = vmatprep.subr.mxu0 0.0
        %2314 = vmatpush2.msra.mxu0 0.0
        %2315 = vmatprep.subr.mxu0 0.0
        %2316 = vmatpush2.msra.mxu0 0.0
        %2317 = vmatprep.subr.mxu0 0.0
        %2318 = vmatpush2.msra.mxu0 0.0
        %2319 = vmatprep.subr.mxu0 0.0
        %2320 = vmatpush2.msra.mxu0 0.0
        %2321 = vmatprep.subr.mxu0 0.0
        %2322 = vmatpush2.msra.mxu0 0.0
        %2323 = vmatprep.subr.mxu0 0.0
        %2324 = vmatpush2.msra.mxu0 0.0
        %2325 = vmatprep.subr.mxu0 0.0
        %2326 = vmatpush2.msra.mxu0 0.0
        %2327 = vmatprep.subr.mxu0 0.0
        %2328 = vmatpush2.msra.mxu0 0.0
        %2329 = vmatprep.subr.mxu0 0.0
        %2330 = vmatpush2.msra.mxu0 0.0
        %2331 = vmatprep.subr.mxu0 0.0
        %2332 = vmatpush2.msra.mxu0 0.0
        %2333 = vmatprep.subr.mxu0 0.0
        %2334 = vmatpush2.msra.mxu0 0.0
        %2335 = vmatprep.subr.mxu0 0.0
        %2336 = vmatpush2.msra.mxu0 0.0
        %2337 = vmatprep.subr.mxu0 0.0
        %2338 = vmatpush2.msra.mxu0 0.0
        %2339 = vmatprep.subr.mxu0 0.0
        %2340 = vmatpush2.msra.mxu0 0.0
        %2341 = vmatprep.subr.mxu0 0.0
        %2342 = vmatpush2.msra.mxu0 0.0
        %2343 = vmatprep.mubr.f32.mxu0 0.0
        %2344 = vmatmul.mubr.f32.gmra.mxu0 %v2163
        %v2345 = vpop.f32.mrf.mxu0
        %v2346 = vadd.f32 %v2276, %v2345
        %v2347 = vpop.f32.mrf.mxu0
        %2348 = vdwg.mxu0
        %v2349 = vld [vmem:[%s6] sm:$0x1]
        %v2351 = vlaneseq
        %v2352 = vshrl.u32 %v2351, 7
        %v2353 = vsub.s32 0, %v2352
        %v2354 = vrot.slane %v2349, %v2353
        %v2356 = vadd.f32 %v2346, %v2354
        %2357 = vmax.xlane.f32.xlu0 %v2356
        %v2358 = vpop.xlane.xlu0 %2357
        %v2359 = vsub.f32 %v2356, %v2358
        %v2360 = vmul.f32 %v2359, 1.442695
        %v2361 = vpow.pop %v2360
        %2362 = vadd.xlane.f32.xlu0 %v2361
        %v2363 = vpop.xlane.xlu0 %2362
        %v2364 = vlog2.pop %v2363
        %v2365 = vmul.f32 %v2364, 0.6931472
        %v2366 = vsub.f32 %v2359, %v2365
        %2367 = vst [vmem:[%s307] sm:$0xff] %v2366
        %s2368 = sand.u32 %s162, 1
        %s2369 = scalar_lea.sflag [#allocation6], %s2368
        %s2370 = sand.u32 %s162, 1
        %s2371 = smul.addr %s2370, 8
        %s2372 = scalar_lea.vmem [#allocation13], %s2371
        // Predicated region
        $region65: #{tpu_custom_call.1} parent=43 // pred_check
          %p2373 = pneg %p172
        $region66: #{tpu_custom_call.1} parent=43 // pred_check_branch
          %2375 = sbr.rel (%p2373) target = $region68
        $region67: #{tpu_custom_call.1} parent=43 // pred_region
          %s2377 = ssub.s32 128, 128
          %2378 = vsyncadd %s2369, %s2377
          %s2379 = smul.addr %s28, 128
          %s2380 = scalar_lea.hbm %s7, %s2379
          %s2382 = sshll.u32 %s2372, 4
          %s2383 = int_to_ptr.vmem [resolvable:$true] %s2382
          %2385 = dma.vmem_to_hbm [thread:$0]  %s2383, 128, %s2380, %s2369
        $region68: #{tpu_custom_call.1} parent=43 // pred_fallthru
          _
      $region44: #{tpu_custom_call.1} parent=5 // pred_fallthru
        _
      %p2386 = scmp.le.s32.totalorder 2, %s23
      // Predicated region
      $region69: #{tpu_custom_call.1} parent=5 // pred_check
        %p2387 = pneg %p2386
      $region70: #{tpu_custom_call.1} parent=5 // pred_check_branch
        %2389 = sbr.rel (%p2387) target = $region72
      $region71: #{tpu_custom_call.1} parent=5 // pred_region
        %s2390 = ssub.s32 %s23, 2
        // Predicated region
        $region73: #{tpu_custom_call.1} parent=71 // pred_check
          %p2391 = pneg %p178
        $region74: #{tpu_custom_call.1} parent=71 // pred_check_branch
          %2393 = sbr.rel (%p2391) target = $region76
        $region75: #{tpu_custom_call.1} parent=71 // pred_region
          %s2394 = sand.u32 %s163, 1
          %s2395 = scalar_lea.sflag [#allocation6], %s2394
          %s2396 = sand.u32 %s163, 1
          %s2397 = smul.addr %s2396, 8
          %s2398 = scalar_lea.vmem [#allocation13], %s2397
          %2399 = dma.done %s2395, 128
        $region76: #{tpu_custom_call.1} parent=71 // pred_fallthru
          _
      $region72: #{tpu_custom_call.1} parent=5 // pred_fallthru
        _
    $region6: #{tpu_custom_call.1} parent=1 // loop_footer
      %s27 = sadd.s32 1, %s23
    $region7: #{tpu_custom_call.1} parent=1 // loop_footer_branch
      %22 = sbr.rel target = $region3
    $region8: #{tpu_custom_call.1} parent=1 // loop_exit
      _
    %2400 = vsyncpa [#allocation5], 1
    %s2401 = scalar_lea.sflag [#allocation5], 1
    %2402 = vsyncpa %s2401, 1
    %2403 = vsyncpa [#allocation8], 1
    %2404 = vsyncpa [#allocation11], 1
    %2405 = vsyncpa [#allocation6], 1
    %s2406 = scalar_lea.sflag [#allocation6], 1
    %2407 = vsyncpa %s2406, 1

</llo_original>
